<compile_context>
chip_gen: v6e
topology: v6e:2x2x1
jax: 0.10.0
libtpu: 0.0.40
codegen_flags: <defaults>
</compile_context>

<pallas_src>
import functools
import math

import jax
import jax.numpy as jnp
from jax.experimental import pallas as pl
from jax.experimental.pallas import tpu as pltpu

VMEM_SPEC = pl.BlockSpec(memory_space=pltpu.MemorySpace.VMEM)

CFG = dict(vocab_size=128, max_pos=16, type_vocab=2,
           hidden=32, n_heads=2, head_dim=16, intermediate=64,
           n_layers=2, num_tasks=3, num_labels=4, ln_eps=1e-12)

HEAD_PAD = 128   # pad the fused task-head output to a lane-dense 128-wide slab


# ----------------------------- in-kernel helpers ----------------------------

def _layernorm(x, g, b, eps):
    mu = jnp.mean(x, axis=-1, keepdims=True)
    xc = x - mu
    var = jnp.mean(xc * xc, axis=-1, keepdims=True)
    return xc * jax.lax.rsqrt(var + eps) * g + b


def _erf(x):
    # Abramowitz & Stegun 7.1.26 (|error| < 1.5e-7): float32-exact for our
    # purposes, uses only elementwise ops that lower cleanly in Mosaic.
    a1, a2, a3, a4, a5 = (0.254829592, -0.284496736, 1.421413741,
                          -1.453152027, 1.061405429)
    p = 0.3275911
    z = jnp.abs(x)
    t = 1.0 / (1.0 + p * z)
    poly = ((((a5 * t + a4) * t + a3) * t + a2) * t + a1) * t
    y = 1.0 - poly * jnp.exp(-z * z)
    return jnp.where(x >= 0.0, y, -y)


def _gelu_exact(x):
    # HF BERT uses exact erf GELU (not the tanh approximation).
    return 0.5 * x * (1.0 + _erf(x * (1.0 / math.sqrt(2.0))))


# ------------------------ fused encoder-stack kernel ------------------------

def _encoder_kernel(emb_ref, mask_ref, emb_g_ref, emb_b_ref,
                    qkv_w_ref, qkv_b_ref, o_w_ref, o_b_ref,
                    ln1_g_ref, ln1_b_ref, i_w_ref, i_b_ref,
                    f_w_ref, f_b_ref, ln2_g_ref, ln2_b_ref,
                    out_ref, state_ref,
                    *, B, S, H, nH, Dh, eps, scale):
    l = pl.program_id(0)

    @pl.when(l == 0)
    def _():
        # Embedding LayerNorm fused into the first grid step (no extra launch,
        # no fake zero residual).
        state_ref[...] = _layernorm(emb_ref[...], emb_g_ref[...],
                                    emb_b_ref[...], eps)

    h = state_ref[...]                                    # (B*S, H), VMEM-resident

    # Fused QKV projection: one (B*S, H) x (H, 3H) MXU push.
    qkv = (jnp.dot(h, qkv_w_ref[0], preferred_element_type=jnp.float32)
           + qkv_b_ref[0])

    mask_b = mask_ref[...][:, None, :]                    # (B, 1, S) additive bias
    o_w = o_w_ref[0]

    attn = jnp.zeros((B * S, H), jnp.float32)
    for hd in range(nH):                                  # static unroll over heads
        q = qkv[:, hd * Dh:(hd + 1) * Dh].reshape(B, S, Dh)
        k = qkv[:, H + hd * Dh:H + (hd + 1) * Dh].reshape(B, S, Dh)
        v = qkv[:, 2 * H + hd * Dh:2 * H + (hd + 1) * Dh].reshape(B, S, Dh)

        s = jnp.einsum("bqd,bkd->bqk", q, k,
                       preferred_element_type=jnp.float32)
        s = s * scale + mask_b
        s = s - jnp.max(s, axis=-1, keepdims=True)
        p = jnp.exp(s)
        p = p * pl.reciprocal(jnp.sum(p, axis=-1, keepdims=True), approx=True)
        ctx = jnp.einsum("bqk,bkd->bqd", p, v,
                         preferred_element_type=jnp.float32)
        # Merge heads by accumulating ctx_h @ W_o[h*Dh:(h+1)*Dh, :]
        attn = attn + jnp.dot(ctx.reshape(B * S, Dh),
                              o_w[hd * Dh:(hd + 1) * Dh, :],
                              preferred_element_type=jnp.float32)
    attn = attn + o_b_ref[0]

    h1 = _layernorm(attn + h, ln1_g_ref[0], ln1_b_ref[0], eps)
    ff = jnp.dot(h1, i_w_ref[0], preferred_element_type=jnp.float32) + i_b_ref[0]
    ff = _gelu_exact(ff)
    ff = jnp.dot(ff, f_w_ref[0], preferred_element_type=jnp.float32) + f_b_ref[0]
    h2 = _layernorm(ff + h1, ln2_g_ref[0], ln2_b_ref[0], eps)

    state_ref[...] = h2
    out_ref[...] = h2


def bert_encoder(emb2d, mask_add, params, cfg):
    B, S = mask_add.shape
    H, nH, Dh = cfg["hidden"], cfg["n_heads"], cfg["head_dim"]
    I, L = cfg["intermediate"], cfg["n_layers"]
    BS = B * S

    const = lambda shape: pl.BlockSpec(shape, lambda l: (0,) * len(shape))
    per_layer = lambda shape: pl.BlockSpec((1,) + shape, lambda l: (l, 0, 0))

    kernel = functools.partial(_encoder_kernel, B=B, S=S, H=H, nH=nH, Dh=Dh,
                               eps=cfg["ln_eps"], scale=1.0 / math.sqrt(Dh))
    return pl.pallas_call(
        kernel,
        out_shape=jax.ShapeDtypeStruct((BS, H), jnp.float32),
        grid_spec=pltpu.PrefetchScalarGridSpec(
            num_scalar_prefetch=0,
            grid=(L,),
            in_specs=[
                const((BS, H)),           # summed embeddings
                const((B, S)),            # additive attention-mask rows
                const((1, H)),            # embedding LN gamma
                const((1, H)),            # embedding LN beta
                per_layer((H, 3 * H)),    # fused QKV weight
                per_layer((1, 3 * H)),    # fused QKV bias
                per_layer((H, H)),        # attention output weight
                per_layer((1, H)),        # attention output bias
                per_layer((1, H)),        # LN1 gamma
                per_layer((1, H)),        # LN1 beta
                per_layer((H, I)),        # FFN in weight
                per_layer((1, I)),        # FFN in bias
                per_layer((I, H)),        # FFN out weight
                per_layer((1, H)),        # FFN out bias
                per_layer((1, H)),        # LN2 gamma
                per_layer((1, H)),        # LN2 beta
            ],
            out_specs=pl.BlockSpec((BS, H), lambda l: (0, 0)),
            scratch_shapes=[pltpu.VMEM((BS, H), jnp.float32)],
        ),
        compiler_params=pltpu.CompilerParams(
            dimension_semantics=("arbitrary",)),   # layers are sequential
    )(emb2d, mask_add,
      params["emb_ln_g"].reshape(1, H), params["emb_ln_b"].reshape(1, H),
      params["qkv_w"], params["qkv_b"], params["o_w"], params["o_b"],
      params["ln1_g"], params["ln1_b"], params["i_w"], params["i_b"],
      params["f_w"], params["f_b"], params["ln2_g"], params["ln2_b"])


# ----------------------- fused pooler + task-heads kernel --------------------

def _pooler_heads_kernel(cls_ref, pw_ref, pb_ref, hw_ref, hb_ref,
                         logits_ref, probs_ref):
    pooled = jnp.tanh(jnp.dot(cls_ref[...], pw_ref[...],
                              preferred_element_type=jnp.float32) + pb_ref[...])
    # classifier dropout: identity in eval mode
    y = jnp.dot(pooled, hw_ref[...],
                preferred_element_type=jnp.float32) + hb_ref[...]
    logits_ref[...] = y
    probs_ref[...] = jax.nn.sigmoid(y)


def pooler_and_heads(cls, pooler_w, pooler_b, heads_w_pad, heads_b_pad):
    B, H = cls.shape
    N = heads_w_pad.shape[1]                 # 128 (lane-dense padded output)
    return pl.pallas_call(
        _pooler_heads_kernel,
        out_shape=(jax.ShapeDtypeStruct((B, N), jnp.float32),
                   jax.ShapeDtypeStruct((B, N), jnp.float32)),
        in_specs=[VMEM_SPEC] * 5,
        out_specs=(VMEM_SPEC, VMEM_SPEC),
    )(cls, pooler_w, pooler_b.reshape(1, H),
      heads_w_pad, heads_b_pad.reshape(1, N))


# --------------------------- parameters / forward ---------------------------

def init_params(key, cfg):
    def nrm(k, shape, std=0.02):
        return std * jax.random.normal(k, shape, dtype=jnp.float32)

    keys = iter(jax.random.split(key, 64))
    H, I, L = cfg["hidden"], cfg["intermediate"], cfg["n_layers"]
    p = {
        "word_emb": nrm(next(keys), (cfg["vocab_size"], H)),
        "pos_emb": nrm(next(keys), (cfg["max_pos"], H)),
        "type_emb": nrm(next(keys), (cfg["type_vocab"], H)),
        "emb_ln_g": jnp.ones((H,), jnp.float32),
        "emb_ln_b": jnp.zeros((H,), jnp.float32),
        "pooler_w": nrm(next(keys), (H, H)),
        "pooler_b": jnp.zeros((H,), jnp.float32),
        # Per-layer params stacked on a leading layer axis; Q|K|V fused.
        "qkv_w": nrm(next(keys), (L, H, 3 * H)),
        "qkv_b": jnp.zeros((L, 1, 3 * H), jnp.float32),
        "o_w": nrm(next(keys), (L, H, H)),
        "o_b": jnp.zeros((L, 1, H), jnp.float32),
        "ln1_g": jnp.ones((L, 1, H), jnp.float32),
        "ln1_b": jnp.zeros((L, 1, H), jnp.float32),
        "i_w": nrm(next(keys), (L, H, I)),
        "i_b": jnp.zeros((L, 1, I), jnp.float32),
        "f_w": nrm(next(keys), (L, I, H)),
        "f_b": jnp.zeros((L, 1, H), jnp.float32),
        "ln2_g": jnp.ones((L, 1, H), jnp.float32),
        "ln2_b": jnp.zeros((L, 1, H), jnp.float32),
    }
    TL = cfg["num_tasks"] * cfg["num_labels"]
    heads_w = nrm(next(keys), (H, TL))
    # All task heads fused and padded to 128 output lanes (zero padding);
    # the real logits live in columns [:TL].
    p["heads_w"] = jnp.zeros((H, HEAD_PAD), jnp.float32).at[:, :TL].set(heads_w)
    p["heads_b"] = jnp.zeros((HEAD_PAD,), jnp.float32)
    return p


def bert_multitask_multilabel_forward(params, input_ids, attention_mask,
                                      token_type_ids, labels=None, cfg=CFG):
    B, S = input_ids.shape
    H = cfg["hidden"]
    T, Lb = cfg["num_tasks"], cfg["num_labels"]

    # ---- embeddings: gathers are tiny glue; the sum + LayerNorm run inside
    #      the encoder kernel's first grid step ----
    pos_ids = jnp.arange(S)
    emb = (jnp.take(params["word_emb"], input_ids, axis=0)
           + jnp.take(params["pos_emb"], pos_ids, axis=0)[None, :, :]
           + jnp.take(params["type_emb"], token_type_ids, axis=0))
    emb2d = emb.reshape(B * S, H)

    # (B, S) additive mask rows; broadcast to (B, S, S) inside the kernel
    # (no (B*heads, S, S) HBM tensor).
    mask_add = (1.0 - attention_mask.astype(jnp.float32)) * -10000.0

    # ---- whole encoder stack: one pallas_call, grid over layers ----
    h = bert_encoder(emb2d, mask_add, params, cfg)

    # ---- pooler + all task heads + sigmoid: one pallas_call ----
    cls = h.reshape(B, S, H)[:, 0, :]
    logits_pad, probs_pad = pooler_and_heads(cls, params["pooler_w"],
                                             params["pooler_b"],
                                             params["heads_w"],
                                             params["heads_b"])
    TL = T * Lb
    logits = logits_pad[:, :TL].reshape(B, T, Lb)
    preds = probs_pad[:, :TL].reshape(B, T, Lb)   # == torch.stack(pred_list).permute(1,0,2)

    loss = None
    if labels is not None:
        # BCEWithLogitsLoss (mean per task) summed over tasks — reduction glue.
        z = labels.astype(jnp.float32)
        x = logits
        bce = jnp.maximum(x, 0.0) - x * z + jnp.log1p(jnp.exp(-jnp.abs(x)))
        loss = jnp.sum(jnp.mean(bce, axis=(0, 2)))
    return loss, preds


if __name__ == "__main__":
    key = jax.random.PRNGKey(0)
    k_param, k_ids, k_labels = jax.random.split(key, 3)
    params = init_params(k_param, CFG)

    B, S = 2, 8
    input_ids = jax.random.randint(k_ids, (B, S), 0, CFG["vocab_size"],
                                   dtype=jnp.int32)
    attention_mask = jnp.ones((B, S), jnp.int32).at[1, 6:].set(0)
    token_type_ids = jnp.zeros((B, S), jnp.int32)
    labels = jax.random.bernoulli(
        k_labels, 0.5,
        (B, CFG["num_tasks"], CFG["num_labels"])).astype(jnp.float32)

    fwd = jax.jit(functools.partial(bert_multitask_multilabel_forward, cfg=CFG))
    loss, preds = fwd(params, input_ids, attention_mask, token_type_ids, labels)
    jax.block_until_ready((loss, preds))
    assert preds.shape == (B, CFG["num_tasks"], CFG["num_labels"])
    assert preds.dtype == jnp.float32
    print("KERNEL_OK")
</pallas_src>

<mosaic_0001>
module attributes {stable_mosaic.version = 11 : i64} {
  func.func @_pooler_heads_kernel(%arg0: memref<2x32xf32, #tpu.memory_space<vmem>>, %arg1: memref<32x32xf32, #tpu.memory_space<vmem>>, %arg2: memref<1x32xf32, #tpu.memory_space<vmem>>, %arg3: memref<32x128xf32, #tpu.memory_space<vmem>>, %arg4: memref<1x128xf32, #tpu.memory_space<vmem>>, %arg5: memref<2x128xf32, #tpu.memory_space<vmem>>, %arg6: memref<2x128xf32, #tpu.memory_space<vmem>>) attributes {dimension_semantics = [], scalar_prefetch = 0 : i64, scratch_operands = 0 : i64, tpu.core_type = #tpu.core_type<tc>} {
    %c0 = arith.constant 0 : index
    %c0_0 = arith.constant 0 : index
    %0 = vector.load %arg0[%c0, %c0_0] : memref<2x32xf32, #tpu.memory_space<vmem>>, vector<2x32xf32>
    %c0_1 = arith.constant 0 : index
    %c0_2 = arith.constant 0 : index
    %1 = vector.load %arg1[%c0_1, %c0_2] : memref<32x32xf32, #tpu.memory_space<vmem>>, vector<32x32xf32>
    %cst = arith.constant dense<0.000000e+00> : vector<2x32xf32>
    %2 = tpu.matmul %0, %1, %cst {dimension_numbers = #tpu.dot_dimension_numbers<[1], [0], [0], [1], [0, 0, 1, 1], [], []>} : vector<2x32xf32>, vector<32x32xf32>, vector<2x32xf32> -> vector<2x32xf32>
    %c0_3 = arith.constant 0 : index
    %c0_4 = arith.constant 0 : index
    %3 = vector.load %arg2[%c0_3, %c0_4] : memref<1x32xf32, #tpu.memory_space<vmem>>, vector<1x32xf32>
    %4 = vector.broadcast %3 : vector<1x32xf32> to vector<2x32xf32>
    %5 = arith.addf %2, %4 : vector<2x32xf32>
    %6 = math.tanh %5 : vector<2x32xf32>
    %c0_5 = arith.constant 0 : index
    %c0_6 = arith.constant 0 : index
    %7 = vector.load %arg3[%c0_5, %c0_6] : memref<32x128xf32, #tpu.memory_space<vmem>>, vector<32x128xf32>
    %cst_7 = arith.constant dense<0.000000e+00> : vector<2x128xf32>
    %8 = tpu.matmul %6, %7, %cst_7 {dimension_numbers = #tpu.dot_dimension_numbers<[1], [0], [0], [1], [0, 0, 1, 1], [], []>} : vector<2x32xf32>, vector<32x128xf32>, vector<2x128xf32> -> vector<2x128xf32>
    %c0_8 = arith.constant 0 : index
    %c0_9 = arith.constant 0 : index
    %9 = vector.load %arg4[%c0_8, %c0_9] : memref<1x128xf32, #tpu.memory_space<vmem>>, vector<1x128xf32>
    %10 = vector.broadcast %9 : vector<1x128xf32> to vector<2x128xf32>
    %11 = arith.addf %8, %10 : vector<2x128xf32>
    %c0_10 = arith.constant 0 : index
    %c0_11 = arith.constant 0 : index
    %12 = vector.load %arg5[%c0_10, %c0_11] : memref<2x128xf32, #tpu.memory_space<vmem>>, vector<2x128xf32>
    tpu.vector_store %arg5[%c0_10, %c0_11], %11 {strides = array<i32>} : memref<2x128xf32, #tpu.memory_space<vmem>>, vector<2x128xf32>,
    %13 = arith.negf %11 : vector<2x128xf32>
    %14 = math.exp %13 : vector<2x128xf32>
    %cst_12 = arith.constant 1.000000e+00 : f32
    %15 = vector.broadcast %cst_12 : f32 to vector<2x128xf32>
    %16 = arith.addf %15, %14 : vector<2x128xf32>
    %17 = arith.divf %15, %16 : vector<2x128xf32>
    %c0_13 = arith.constant 0 : index
    %c0_14 = arith.constant 0 : index
    %18 = vector.load %arg6[%c0_13, %c0_14] : memref<2x128xf32, #tpu.memory_space<vmem>>, vector<2x128xf32>
    tpu.vector_store %arg6[%c0_13, %c0_14], %17 {strides = array<i32>} : memref<2x128xf32, #tpu.memory_space<vmem>>, vector<2x128xf32>,
    return
  }
}

module attributes {stable_mosaic.version = 11 : i64} {
  func.func @_encoder_kernel(%arg0: i32, %arg1: memref<16x32xf32, #tpu.memory_space<vmem>>, %arg2: memref<2x8xf32, #tpu.memory_space<vmem>>, %arg3: memref<1x32xf32, #tpu.memory_space<vmem>>, %arg4: memref<1x32xf32, #tpu.memory_space<vmem>>, %arg5: memref<1x32x96xf32, #tpu.memory_space<vmem>>, %arg6: memref<1x1x96xf32, #tpu.memory_space<vmem>>, %arg7: memref<1x32x32xf32, #tpu.memory_space<vmem>>, %arg8: memref<1x1x32xf32, #tpu.memory_space<vmem>>, %arg9: memref<1x1x32xf32, #tpu.memory_space<vmem>>, %arg10: memref<1x1x32xf32, #tpu.memory_space<vmem>>, %arg11: memref<1x32x64xf32, #tpu.memory_space<vmem>>, %arg12: memref<1x1x64xf32, #tpu.memory_space<vmem>>, %arg13: memref<1x64x32xf32, #tpu.memory_space<vmem>>, %arg14: memref<1x1x32xf32, #tpu.memory_space<vmem>>, %arg15: memref<1x1x32xf32, #tpu.memory_space<vmem>>, %arg16: memref<1x1x32xf32, #tpu.memory_space<vmem>>, %arg17: memref<16x32xf32, #tpu.memory_space<vmem>>, %arg18: memref<16x32xf32, #tpu.memory_space<vmem>>) attributes {dimension_semantics = [#tpu.dimension_semantics<arbitrary>], iteration_bounds = array<i64: 2>, scalar_prefetch = 0 : i64, scratch_operands = 1 : i64, tpu.core_type = #tpu.core_type<tc>, window_params = [{pipeline_mode = #tpu.pipeline_mode<synchronous>, transform_indices = @transform_0, window_bounds = array<i64: 16, 32>}, {pipeline_mode = #tpu.pipeline_mode<synchronous>, transform_indices = @transform_1, window_bounds = array<i64: 2, 8>}, {pipeline_mode = #tpu.pipeline_mode<synchronous>, transform_indices = @transform_2, window_bounds = array<i64: 1, 32>}, {pipeline_mode = #tpu.pipeline_mode<synchronous>, transform_indices = @transform_3, window_bounds = array<i64: 1, 32>}, {transform_indices = @transform_4, window_bounds = array<i64: 1, 32, 96>}, {transform_indices = @transform_5, window_bounds = array<i64: 1, 1, 96>}, {transform_indices = @transform_6, window_bounds = array<i64: 1, 32, 32>}, {transform_indices = @transform_7, window_bounds = array<i64: 1, 1, 32>}, {transform_indices = @transform_8, window_bounds = array<i64: 1, 1, 32>}, {transform_indices = @transform_9, window_bounds = array<i64: 1, 1, 32>}, {transform_indices = @transform_10, window_bounds = array<i64: 1, 32, 64>}, {transform_indices = @transform_11, window_bounds = array<i64: 1, 1, 64>}, {transform_indices = @transform_12, window_bounds = array<i64: 1, 64, 32>}, {transform_indices = @transform_13, window_bounds = array<i64: 1, 1, 32>}, {transform_indices = @transform_14, window_bounds = array<i64: 1, 1, 32>}, {transform_indices = @transform_15, window_bounds = array<i64: 1, 1, 32>}, {pipeline_mode = #tpu.pipeline_mode<synchronous>, transform_indices = @transform_16, window_bounds = array<i64: 16, 32>}]} {
    %c0_i32 = arith.constant 0 : i32
    %0 = arith.cmpi eq, %arg0, %c0_i32 : i32
    %1 = arith.extui %0 : i1 to i32
    %c0_i32_0 = arith.constant 0 : i32
    %2 = arith.cmpi ne, %1, %c0_i32_0 : i32
    scf.if %2 {
      %c0_84 = arith.constant 0 : index
      %c0_85 = arith.constant 0 : index
      %178 = vector.load %arg1[%c0_84, %c0_85] : memref<16x32xf32, #tpu.memory_space<vmem>>, vector<16x32xf32>
      %c0_86 = arith.constant 0 : index
      %c0_87 = arith.constant 0 : index
      %179 = vector.load %arg3[%c0_86, %c0_87] : memref<1x32xf32, #tpu.memory_space<vmem>>, vector<1x32xf32>
      %c0_88 = arith.constant 0 : index
      %c0_89 = arith.constant 0 : index
      %180 = vector.load %arg4[%c0_88, %c0_89] : memref<1x32xf32, #tpu.memory_space<vmem>>, vector<1x32xf32>
      %cst_90 = arith.constant dense<0.000000e+00> : vector<16xf32>
      %181 = vector.multi_reduction <add>, %178, %cst_90 [1] : vector<16x32xf32> to vector<16xf32>
      %182 = vector.shape_cast %181 : vector<16xf32> to vector<16x1xf32>
      %cst_91 = arith.constant 3.200000e+01 : f32
      %183 = vector.broadcast %cst_91 : f32 to vector<16x1xf32>
      %184 = arith.divf %182, %183 : vector<16x1xf32>
      %185 = vector.broadcast %184 : vector<16x1xf32> to vector<16x32xf32>
      %186 = arith.subf %178, %185 : vector<16x32xf32>
      %187 = arith.mulf %186, %186 : vector<16x32xf32>
      %cst_92 = arith.constant dense<0.000000e+00> : vector<16xf32>
      %188 = vector.multi_reduction <add>, %187, %cst_92 [1] : vector<16x32xf32> to vector<16xf32>
      %189 = vector.shape_cast %188 : vector<16xf32> to vector<16x1xf32>
      %cst_93 = arith.constant 3.200000e+01 : f32
      %190 = vector.broadcast %cst_93 : f32 to vector<16x1xf32>
      %191 = arith.divf %189, %190 : vector<16x1xf32>
      %cst_94 = arith.constant 9.99999996E-13 : f32
      %192 = vector.broadcast %cst_94 : f32 to vector<16x1xf32>
      %193 = arith.addf %191, %192 : vector<16x1xf32>
      %194 = math.rsqrt %193 : vector<16x1xf32>
      %195 = vector.broadcast %194 : vector<16x1xf32> to vector<16x32xf32>
      %196 = arith.mulf %186, %195 : vector<16x32xf32>
      %197 = vector.broadcast %179 : vector<1x32xf32> to vector<16x32xf32>
      %198 = arith.mulf %196, %197 : vector<16x32xf32>
      %199 = vector.broadcast %180 : vector<1x32xf32> to vector<16x32xf32>
      %200 = arith.addf %198, %199 : vector<16x32xf32>
      %c0_95 = arith.constant 0 : index
      %c0_96 = arith.constant 0 : index
      %201 = vector.load %arg18[%c0_95, %c0_96] : memref<16x32xf32, #tpu.memory_space<vmem>>, vector<16x32xf32>
      tpu.vector_store %arg18[%c0_95, %c0_96], %200 {strides = array<i32>} : memref<16x32xf32, #tpu.memory_space<vmem>>, vector<16x32xf32>,
    } else {
    }
    %c0 = arith.constant 0 : index
    %c0_1 = arith.constant 0 : index
    %3 = vector.load %arg18[%c0, %c0_1] : memref<16x32xf32, #tpu.memory_space<vmem>>, vector<16x32xf32>
    %c0_2 = arith.constant 0 : index
    %c0_3 = arith.constant 0 : index
    %c0_4 = arith.constant 0 : index
    %4 = vector.load %arg5[%c0_2, %c0_3, %c0_4] : memref<1x32x96xf32, #tpu.memory_space<vmem>>, vector<1x32x96xf32>
    %5 = vector.shape_cast %4 : vector<1x32x96xf32> to vector<32x96xf32>
    %cst = arith.constant dense<0.000000e+00> : vector<16x96xf32>
    %6 = tpu.matmul %3, %5, %cst {dimension_numbers = #tpu.dot_dimension_numbers<[1], [0], [0], [1], [0, 0, 1, 1], [], []>} : vector<16x32xf32>, vector<32x96xf32>, vector<16x96xf32> -> vector<16x96xf32>
    %c0_5 = arith.constant 0 : index
    %c0_6 = arith.constant 0 : index
    %c0_7 = arith.constant 0 : index
    %7 = vector.load %arg6[%c0_5, %c0_6, %c0_7] : memref<1x1x96xf32, #tpu.memory_space<vmem>>, vector<1x1x96xf32>
    %8 = vector.shape_cast %7 : vector<1x1x96xf32> to vector<1x96xf32>
    %9 = vector.broadcast %8 : vector<1x96xf32> to vector<16x96xf32>
    %10 = arith.addf %6, %9 : vector<16x96xf32>
    %c0_8 = arith.constant 0 : index
    %c0_9 = arith.constant 0 : index
    %11 = vector.load %arg2[%c0_8, %c0_9] : memref<2x8xf32, #tpu.memory_space<vmem>>, vector<2x8xf32>
    %12 = vector.shape_cast %11 : vector<2x8xf32> to vector<2x1x8xf32>
    %c0_10 = arith.constant 0 : index
    %c0_11 = arith.constant 0 : index
    %c0_12 = arith.constant 0 : index
    %13 = vector.load %arg7[%c0_10, %c0_11, %c0_12] : memref<1x32x32xf32, #tpu.memory_space<vmem>>, vector<1x32x32xf32>
    %14 = vector.shape_cast %13 : vector<1x32x32xf32> to vector<32x32xf32>
    %cst_13 = arith.constant 0.000000e+00 : f32
    %15 = vector.broadcast %cst_13 : f32 to vector<16x32xf32>
    %16 = vector.extract_strided_slice %10 {offsets = [0, 0], sizes = [16, 16], strides = [1, 1]} : vector<16x96xf32> to vector<16x16xf32>
    %17 = vector.shape_cast %16 : vector<16x16xf32> to vector<2x8x16xf32>
    %18 = vector.extract_strided_slice %10 {offsets = [0, 32], sizes = [16, 16], strides = [1, 1]} : vector<16x96xf32> to vector<16x16xf32>
    %19 = vector.shape_cast %18 : vector<16x16xf32> to vector<2x8x16xf32>
    %20 = vector.extract_strided_slice %10 {offsets = [0, 64], sizes = [16, 16], strides = [1, 1]} : vector<16x96xf32> to vector<16x16xf32>
    %21 = vector.shape_cast %20 : vector<16x16xf32> to vector<2x8x16xf32>
    "tpu.trace_start"() <{level = 10 : i32, message = "bqd,bkd->bqk"}> : () -> ()
    %cst_14 = arith.constant dense<0.000000e+00> : vector<2x8x8xf32>
    %22 = tpu.matmul %17, %19, %cst_14 {dimension_numbers = #tpu.dot_dimension_numbers<[2], [2], [1], [1], [0, 0, 0, 1, 1, 1], [0], [0]>} : vector<2x8x16xf32>, vector<2x8x16xf32>, vector<2x8x8xf32> -> vector<2x8x8xf32>
    "tpu.trace_stop"() : () -> ()
    %cst_15 = arith.constant 2.500000e-01 : f32
    %23 = vector.broadcast %cst_15 : f32 to vector<2x8x8xf32>
    %24 = arith.mulf %22, %23 : vector<2x8x8xf32>
    %25 = vector.broadcast %12 : vector<2x1x8xf32> to vector<2x8x8xf32>
    %26 = arith.addf %24, %25 : vector<2x8x8xf32>
    %cst_16 = arith.constant dense<0xFF800000> : vector<2x8xf32>
    %27 = vector.multi_reduction <maximumf>, %26, %cst_16 [2] : vector<2x8x8xf32> to vector<2x8xf32>
    %28 = vector.shape_cast %27 : vector<2x8xf32> to vector<2x8x1xf32>
    %29 = vector.broadcast %28 : vector<2x8x1xf32> to vector<2x8x8xf32>
    %30 = arith.subf %26, %29 : vector<2x8x8xf32>
    %31 = math.exp %30 : vector<2x8x8xf32>
    %cst_17 = arith.constant dense<0.000000e+00> : vector<2x8xf32>
    %32 = vector.multi_reduction <add>, %31, %cst_17 [2] : vector<2x8x8xf32> to vector<2x8xf32>
    %33 = vector.shape_cast %32 : vector<2x8xf32> to vector<2x8x1xf32>
    %34 = tpu.reciprocal %33 {approx = true} : vector<2x8x1xf32> -> vector<2x8x1xf32>
    %35 = vector.broadcast %34 : vector<2x8x1xf32> to vector<2x8x8xf32>
    %36 = arith.mulf %31, %35 : vector<2x8x8xf32>
    "tpu.trace_start"() <{level = 10 : i32, message = "bqk,bkd->bqd"}> : () -> ()
    %cst_18 = arith.constant dense<0.000000e+00> : vector<2x8x16xf32>
    %37 = tpu.matmul %36, %21, %cst_18 {dimension_numbers = #tpu.dot_dimension_numbers<[2], [1], [1], [2], [0, 0, 0, 1, 1, 2], [0], [0]>} : vector<2x8x8xf32>, vector<2x8x16xf32>, vector<2x8x16xf32> -> vector<2x8x16xf32>
    "tpu.trace_stop"() : () -> ()
    %38 = vector.shape_cast %37 : vector<2x8x16xf32> to vector<16x16xf32>
    %39 = vector.extract_strided_slice %14 {offsets = [0, 0], sizes = [16, 32], strides = [1, 1]} : vector<32x32xf32> to vector<16x32xf32>
    %cst_19 = arith.constant dense<0.000000e+00> : vector<16x32xf32>
    %40 = tpu.matmul %38, %39, %cst_19 {dimension_numbers = #tpu.dot_dimension_numbers<[1], [0], [0], [1], [0, 0, 1, 1], [], []>} : vector<16x16xf32>, vector<16x32xf32>, vector<16x32xf32> -> vector<16x32xf32>
    %41 = arith.addf %15, %40 : vector<16x32xf32>
    %42 = vector.extract_strided_slice %10 {offsets = [0, 16], sizes = [16, 16], strides = [1, 1]} : vector<16x96xf32> to vector<16x16xf32>
    %43 = vector.shape_cast %42 : vector<16x16xf32> to vector<2x8x16xf32>
    %44 = vector.extract_strided_slice %10 {offsets = [0, 48], sizes = [16, 16], strides = [1, 1]} : vector<16x96xf32> to vector<16x16xf32>
    %45 = vector.shape_cast %44 : vector<16x16xf32> to vector<2x8x16xf32>
    %46 = vector.extract_strided_slice %10 {offsets = [0, 80], sizes = [16, 16], strides = [1, 1]} : vector<16x96xf32> to vector<16x16xf32>
    %47 = vector.shape_cast %46 : vector<16x16xf32> to vector<2x8x16xf32>
    "tpu.trace_start"() <{level = 10 : i32, message = "bqd,bkd->bqk"}> : () -> ()
    %cst_20 = arith.constant dense<0.000000e+00> : vector<2x8x8xf32>
    %48 = tpu.matmul %43, %45, %cst_20 {dimension_numbers = #tpu.dot_dimension_numbers<[2], [2], [1], [1], [0, 0, 0, 1, 1, 1], [0], [0]>} : vector<2x8x16xf32>, vector<2x8x16xf32>, vector<2x8x8xf32> -> vector<2x8x8xf32>
    "tpu.trace_stop"() : () -> ()
    %cst_21 = arith.constant 2.500000e-01 : f32
    %49 = vector.broadcast %cst_21 : f32 to vector<2x8x8xf32>
    %50 = arith.mulf %48, %49 : vector<2x8x8xf32>
    %51 = vector.broadcast %12 : vector<2x1x8xf32> to vector<2x8x8xf32>
    %52 = arith.addf %50, %51 : vector<2x8x8xf32>
    %cst_22 = arith.constant dense<0xFF800000> : vector<2x8xf32>
    %53 = vector.multi_reduction <maximumf>, %52, %cst_22 [2] : vector<2x8x8xf32> to vector<2x8xf32>
    %54 = vector.shape_cast %53 : vector<2x8xf32> to vector<2x8x1xf32>
    %55 = vector.broadcast %54 : vector<2x8x1xf32> to vector<2x8x8xf32>
    %56 = arith.subf %52, %55 : vector<2x8x8xf32>
    %57 = math.exp %56 : vector<2x8x8xf32>
    %cst_23 = arith.constant dense<0.000000e+00> : vector<2x8xf32>
    %58 = vector.multi_reduction <add>, %57, %cst_23 [2] : vector<2x8x8xf32> to vector<2x8xf32>
    %59 = vector.shape_cast %58 : vector<2x8xf32> to vector<2x8x1xf32>
    %60 = tpu.reciprocal %59 {approx = true} : vector<2x8x1xf32> -> vector<2x8x1xf32>
    %61 = vector.broadcast %60 : vector<2x8x1xf32> to vector<2x8x8xf32>
    %62 = arith.mulf %57, %61 : vector<2x8x8xf32>
    "tpu.trace_start"() <{level = 10 : i32, message = "bqk,bkd->bqd"}> : () -> ()
    %cst_24 = arith.constant dense<0.000000e+00> : vector<2x8x16xf32>
    %63 = tpu.matmul %62, %47, %cst_24 {dimension_numbers = #tpu.dot_dimension_numbers<[2], [1], [1], [2], [0, 0, 0, 1, 1, 2], [0], [0]>} : vector<2x8x8xf32>, vector<2x8x16xf32>, vector<2x8x16xf32> -> vector<2x8x16xf32>
    "tpu.trace_stop"() : () -> ()
    %64 = vector.shape_cast %63 : vector<2x8x16xf32> to vector<16x16xf32>
    %65 = vector.extract_strided_slice %14 {offsets = [16, 0], sizes = [16, 32], strides = [1, 1]} : vector<32x32xf32> to vector<16x32xf32>
    %cst_25 = arith.constant dense<0.000000e+00> : vector<16x32xf32>
    %66 = tpu.matmul %64, %65, %cst_25 {dimension_numbers = #tpu.dot_dimension_numbers<[1], [0], [0], [1], [0, 0, 1, 1], [], []>} : vector<16x16xf32>, vector<16x32xf32>, vector<16x32xf32> -> vector<16x32xf32>
    %67 = arith.addf %41, %66 : vector<16x32xf32>
    %c0_26 = arith.constant 0 : index
    %c0_27 = arith.constant 0 : index
    %c0_28 = arith.constant 0 : index
    %68 = vector.load %arg8[%c0_26, %c0_27, %c0_28] : memref<1x1x32xf32, #tpu.memory_space<vmem>>, vector<1x1x32xf32>
    %69 = vector.shape_cast %68 : vector<1x1x32xf32> to vector<1x32xf32>
    %70 = vector.broadcast %69 : vector<1x32xf32> to vector<16x32xf32>
    %71 = arith.addf %67, %70 : vector<16x32xf32>
    %72 = arith.addf %71, %3 : vector<16x32xf32>
    %c0_29 = arith.constant 0 : index
    %c0_30 = arith.constant 0 : index
    %c0_31 = arith.constant 0 : index
    %73 = vector.load %arg9[%c0_29, %c0_30, %c0_31] : memref<1x1x32xf32, #tpu.memory_space<vmem>>, vector<1x1x32xf32>
    %74 = vector.shape_cast %73 : vector<1x1x32xf32> to vector<1x32xf32>
    %c0_32 = arith.constant 0 : index
    %c0_33 = arith.constant 0 : index
    %c0_34 = arith.constant 0 : index
    %75 = vector.load %arg10[%c0_32, %c0_33, %c0_34] : memref<1x1x32xf32, #tpu.memory_space<vmem>>, vector<1x1x32xf32>
    %76 = vector.shape_cast %75 : vector<1x1x32xf32> to vector<1x32xf32>
    %cst_35 = arith.constant dense<0.000000e+00> : vector<16xf32>
    %77 = vector.multi_reduction <add>, %72, %cst_35 [1] : vector<16x32xf32> to vector<16xf32>
    %78 = vector.shape_cast %77 : vector<16xf32> to vector<16x1xf32>
    %cst_36 = arith.constant 3.200000e+01 : f32
    %79 = vector.broadcast %cst_36 : f32 to vector<16x1xf32>
    %80 = arith.divf %78, %79 : vector<16x1xf32>
    %81 = vector.broadcast %80 : vector<16x1xf32> to vector<16x32xf32>
    %82 = arith.subf %72, %81 : vector<16x32xf32>
    %83 = arith.mulf %82, %82 : vector<16x32xf32>
    %cst_37 = arith.constant dense<0.000000e+00> : vector<16xf32>
    %84 = vector.multi_reduction <add>, %83, %cst_37 [1] : vector<16x32xf32> to vector<16xf32>
    %85 = vector.shape_cast %84 : vector<16xf32> to vector<16x1xf32>
    %cst_38 = arith.constant 3.200000e+01 : f32
    %86 = vector.broadcast %cst_38 : f32 to vector<16x1xf32>
    %87 = arith.divf %85, %86 : vector<16x1xf32>
    %cst_39 = arith.constant 9.99999996E-13 : f32
    %88 = vector.broadcast %cst_39 : f32 to vector<16x1xf32>
    %89 = arith.addf %87, %88 : vector<16x1xf32>
    %90 = math.rsqrt %89 : vector<16x1xf32>
    %91 = vector.broadcast %90 : vector<16x1xf32> to vector<16x32xf32>
    %92 = arith.mulf %82, %91 : vector<16x32xf32>
    %93 = vector.broadcast %74 : vector<1x32xf32> to vector<16x32xf32>
    %94 = arith.mulf %92, %93 : vector<16x32xf32>
    %95 = vector.broadcast %76 : vector<1x32xf32> to vector<16x32xf32>
    %96 = arith.addf %94, %95 : vector<16x32xf32>
    %c0_40 = arith.constant 0 : index
    %c0_41 = arith.constant 0 : index
    %c0_42 = arith.constant 0 : index
    %97 = vector.load %arg11[%c0_40, %c0_41, %c0_42] : memref<1x32x64xf32, #tpu.memory_space<vmem>>, vector<1x32x64xf32>
    %98 = vector.shape_cast %97 : vector<1x32x64xf32> to vector<32x64xf32>
    %cst_43 = arith.constant dense<0.000000e+00> : vector<16x64xf32>
    %99 = tpu.matmul %96, %98, %cst_43 {dimension_numbers = #tpu.dot_dimension_numbers<[1], [0], [0], [1], [0, 0, 1, 1], [], []>} : vector<16x32xf32>, vector<32x64xf32>, vector<16x64xf32> -> vector<16x64xf32>
    %c0_44 = arith.constant 0 : index
    %c0_45 = arith.constant 0 : index
    %c0_46 = arith.constant 0 : index
    %100 = vector.load %arg12[%c0_44, %c0_45, %c0_46] : memref<1x1x64xf32, #tpu.memory_space<vmem>>, vector<1x1x64xf32>
    %101 = vector.shape_cast %100 : vector<1x1x64xf32> to vector<1x64xf32>
    %102 = vector.broadcast %101 : vector<1x64xf32> to vector<16x64xf32>
    %103 = arith.addf %99, %102 : vector<16x64xf32>
    %cst_47 = arith.constant 5.000000e-01 : f32
    %104 = vector.broadcast %cst_47 : f32 to vector<16x64xf32>
    %105 = arith.mulf %104, %103 : vector<16x64xf32>
    %cst_48 = arith.constant 0.707106769 : f32
    %106 = vector.broadcast %cst_48 : f32 to vector<16x64xf32>
    %107 = arith.mulf %103, %106 : vector<16x64xf32>
    %108 = math.absf %107 : vector<16x64xf32>
    %cst_49 = arith.constant 0.327591091 : f32
    %109 = vector.broadcast %cst_49 : f32 to vector<16x64xf32>
    %110 = arith.mulf %109, %108 : vector<16x64xf32>
    %cst_50 = arith.constant 1.000000e+00 : f32
    %111 = vector.broadcast %cst_50 : f32 to vector<16x64xf32>
    %112 = arith.addf %111, %110 : vector<16x64xf32>
    %cst_51 = arith.constant 1.000000e+00 : f32
    %113 = vector.broadcast %cst_51 : f32 to vector<16x64xf32>
    %114 = arith.divf %113, %112 : vector<16x64xf32>
    %cst_52 = arith.constant 1.06140542 : f32
    %115 = vector.broadcast %cst_52 : f32 to vector<16x64xf32>
    %116 = arith.mulf %115, %114 : vector<16x64xf32>
    %cst_53 = arith.constant -1.45315206 : f32
    %117 = vector.broadcast %cst_53 : f32 to vector<16x64xf32>
    %118 = arith.addf %116, %117 : vector<16x64xf32>
    %119 = arith.mulf %118, %114 : vector<16x64xf32>
    %cst_54 = arith.constant 1.42141378 : f32
    %120 = vector.broadcast %cst_54 : f32 to vector<16x64xf32>
    %121 = arith.addf %119, %120 : vector<16x64xf32>
    %122 = arith.mulf %121, %114 : vector<16x64xf32>
    %cst_55 = arith.constant -0.284496725 : f32
    %123 = vector.broadcast %cst_55 : f32 to vector<16x64xf32>
    %124 = arith.addf %122, %123 : vector<16x64xf32>
    %125 = arith.mulf %124, %114 : vector<16x64xf32>
    %cst_56 = arith.constant 0.254829586 : f32
    %126 = vector.broadcast %cst_56 : f32 to vector<16x64xf32>
    %127 = arith.addf %125, %126 : vector<16x64xf32>
    %128 = arith.mulf %127, %114 : vector<16x64xf32>
    %cst_57 = arith.constant 0.000000e+00 : f32
    %129 = vector.broadcast %cst_57 : f32 to vector<16x64xf32>
    %130 = arith.subf %129, %108 : vector<16x64xf32>
    %131 = arith.mulf %130, %108 : vector<16x64xf32>
    %132 = math.exp %131 : vector<16x64xf32>
    %133 = arith.mulf %128, %132 : vector<16x64xf32>
    %cst_58 = arith.constant 1.000000e+00 : f32
    %134 = vector.broadcast %cst_58 : f32 to vector<16x64xf32>
    %135 = arith.subf %134, %133 : vector<16x64xf32>
    %cst_59 = arith.constant 0.000000e+00 : f32
    %136 = vector.broadcast %cst_59 : f32 to vector<16x64xf32>
    %137 = arith.cmpf oge, %107, %136 : vector<16x64xf32>
    %cst_60 = arith.constant 0.000000e+00 : f32
    %138 = vector.broadcast %cst_60 : f32 to vector<16x64xf32>
    %139 = arith.subf %138, %135 : vector<16x64xf32>
    %140 = arith.select %137, %135, %139 : vector<16x64xi1>, vector<16x64xf32>
    %cst_61 = arith.constant 1.000000e+00 : f32
    %141 = vector.broadcast %cst_61 : f32 to vector<16x64xf32>
    %142 = arith.addf %141, %140 : vector<16x64xf32>
    %143 = arith.mulf %105, %142 : vector<16x64xf32>
    %c0_62 = arith.constant 0 : index
    %c0_63 = arith.constant 0 : index
    %c0_64 = arith.constant 0 : index
    %144 = vector.load %arg13[%c0_62, %c0_63, %c0_64] : memref<1x64x32xf32, #tpu.memory_space<vmem>>, vector<1x64x32xf32>
    %145 = vector.shape_cast %144 : vector<1x64x32xf32> to vector<64x32xf32>
    %cst_65 = arith.constant dense<0.000000e+00> : vector<16x32xf32>
    %146 = tpu.matmul %143, %145, %cst_65 {dimension_numbers = #tpu.dot_dimension_numbers<[1], [0], [0], [1], [0, 0, 1, 1], [], []>} : vector<16x64xf32>, vector<64x32xf32>, vector<16x32xf32> -> vector<16x32xf32>
    %c0_66 = arith.constant 0 : index
    %c0_67 = arith.constant 0 : index
    %c0_68 = arith.constant 0 : index
    %147 = vector.load %arg14[%c0_66, %c0_67, %c0_68] : memref<1x1x32xf32, #tpu.memory_space<vmem>>, vector<1x1x32xf32>
    %148 = vector.shape_cast %147 : vector<1x1x32xf32> to vector<1x32xf32>
    %149 = vector.broadcast %148 : vector<1x32xf32> to vector<16x32xf32>
    %150 = arith.addf %146, %149 : vector<16x32xf32>
    %151 = arith.addf %150, %96 : vector<16x32xf32>
    %c0_69 = arith.constant 0 : index
    %c0_70 = arith.constant 0 : index
    %c0_71 = arith.constant 0 : index
    %152 = vector.load %arg15[%c0_69, %c0_70, %c0_71] : memref<1x1x32xf32, #tpu.memory_space<vmem>>, vector<1x1x32xf32>
    %153 = vector.shape_cast %152 : vector<1x1x32xf32> to vector<1x32xf32>
    %c0_72 = arith.constant 0 : index
    %c0_73 = arith.constant 0 : index
    %c0_74 = arith.constant 0 : index
    %154 = vector.load %arg16[%c0_72, %c0_73, %c0_74] : memref<1x1x32xf32, #tpu.memory_space<vmem>>, vector<1x1x32xf32>
    %155 = vector.shape_cast %154 : vector<1x1x32xf32> to vector<1x32xf32>
    %cst_75 = arith.constant dense<0.000000e+00> : vector<16xf32>
    %156 = vector.multi_reduction <add>, %151, %cst_75 [1] : vector<16x32xf32> to vector<16xf32>
    %157 = vector.shape_cast %156 : vector<16xf32> to vector<16x1xf32>
    %cst_76 = arith.constant 3.200000e+01 : f32
    %158 = vector.broadcast %cst_76 : f32 to vector<16x1xf32>
    %159 = arith.divf %157, %158 : vector<16x1xf32>
    %160 = vector.broadcast %159 : vector<16x1xf32> to vector<16x32xf32>
    %161 = arith.subf %151, %160 : vector<16x32xf32>
    %162 = arith.mulf %161, %161 : vector<16x32xf32>
    %cst_77 = arith.constant dense<0.000000e+00> : vector<16xf32>
    %163 = vector.multi_reduction <add>, %162, %cst_77 [1] : vector<16x32xf32> to vector<16xf32>
    %164 = vector.shape_cast %163 : vector<16xf32> to vector<16x1xf32>
    %cst_78 = arith.constant 3.200000e+01 : f32
    %165 = vector.broadcast %cst_78 : f32 to vector<16x1xf32>
    %166 = arith.divf %164, %165 : vector<16x1xf32>
    %cst_79 = arith.constant 9.99999996E-13 : f32
    %167 = vector.broadcast %cst_79 : f32 to vector<16x1xf32>
    %168 = arith.addf %166, %167 : vector<16x1xf32>
    %169 = math.rsqrt %168 : vector<16x1xf32>
    %170 = vector.broadcast %169 : vector<16x1xf32> to vector<16x32xf32>
    %171 = arith.mulf %161, %170 : vector<16x32xf32>
    %172 = vector.broadcast %153 : vector<1x32xf32> to vector<16x32xf32>
    %173 = arith.mulf %171, %172 : vector<16x32xf32>
    %174 = vector.broadcast %155 : vector<1x32xf32> to vector<16x32xf32>
    %175 = arith.addf %173, %174 : vector<16x32xf32>
    %c0_80 = arith.constant 0 : index
    %c0_81 = arith.constant 0 : index
    %176 = vector.load %arg18[%c0_80, %c0_81] : memref<16x32xf32, #tpu.memory_space<vmem>>, vector<16x32xf32>
    tpu.vector_store %arg18[%c0_80, %c0_81], %175 {strides = array<i32>} : memref<16x32xf32, #tpu.memory_space<vmem>>, vector<16x32xf32>,
    %c0_82 = arith.constant 0 : index
    %c0_83 = arith.constant 0 : index
    %177 = vector.load %arg17[%c0_82, %c0_83] : memref<16x32xf32, #tpu.memory_space<vmem>>, vector<16x32xf32>
    tpu.vector_store %arg17[%c0_82, %c0_83], %175 {strides = array<i32>} : memref<16x32xf32, #tpu.memory_space<vmem>>, vector<16x32xf32>,
    return
  }
  func.func @transform_0(%arg0: i32) -> (i32, i32) {
    %c0_i32 = arith.constant 0 : i32
    %c0_i32_0 = arith.constant 0 : i32
    %c0_i32_1 = arith.constant 0 : i32
    return %c0_i32, %c0_i32_0 : i32, i32
  }
  func.func @transform_1(%arg0: i32) -> (i32, i32) {
    %c0_i32 = arith.constant 0 : i32
    %c0_i32_0 = arith.constant 0 : i32
    %c0_i32_1 = arith.constant 0 : i32
    return %c0_i32, %c0_i32_0 : i32, i32
  }
  func.func @transform_2(%arg0: i32) -> (i32, i32) {
    %c0_i32 = arith.constant 0 : i32
    %c0_i32_0 = arith.constant 0 : i32
    %c0_i32_1 = arith.constant 0 : i32
    return %c0_i32, %c0_i32_0 : i32, i32
  }
  func.func @transform_3(%arg0: i32) -> (i32, i32) {
    %c0_i32 = arith.constant 0 : i32
    %c0_i32_0 = arith.constant 0 : i32
    %c0_i32_1 = arith.constant 0 : i32
    return %c0_i32, %c0_i32_0 : i32, i32
  }
  func.func @transform_4(%arg0: i32) -> (i32, i32, i32) {
    %c0_i32 = arith.constant 0 : i32
    %c0_i32_0 = arith.constant 0 : i32
    %c0_i32_1 = arith.constant 0 : i32
    return %arg0, %c0_i32, %c0_i32_0 : i32, i32, i32
  }
  func.func @transform_5(%arg0: i32) -> (i32, i32, i32) {
    %c0_i32 = arith.constant 0 : i32
    %c0_i32_0 = arith.constant 0 : i32
    %c0_i32_1 = arith.constant 0 : i32
    return %arg0, %c0_i32, %c0_i32_0 : i32, i32, i32
  }
  func.func @transform_6(%arg0: i32) -> (i32, i32, i32) {
    %c0_i32 = arith.constant 0 : i32
    %c0_i32_0 = arith.constant 0 : i32
    %c0_i32_1 = arith.constant 0 : i32
    return %arg0, %c0_i32, %c0_i32_0 : i32, i32, i32
  }
  func.func @transform_7(%arg0: i32) -> (i32, i32, i32) {
    %c0_i32 = arith.constant 0 : i32
    %c0_i32_0 = arith.constant 0 : i32
    %c0_i32_1 = arith.constant 0 : i32
    return %arg0, %c0_i32, %c0_i32_0 : i32, i32, i32
  }
  func.func @transform_8(%arg0: i32) -> (i32, i32, i32) {
    %c0_i32 = arith.constant 0 : i32
    %c0_i32_0 = arith.constant 0 : i32
    %c0_i32_1 = arith.constant 0 : i32
    return %arg0, %c0_i32, %c0_i32_0 : i32, i32, i32
  }
  func.func @transform_9(%arg0: i32) -> (i32, i32, i32) {
    %c0_i32 = arith.constant 0 : i32
    %c0_i32_0 = arith.constant 0 : i32
    %c0_i32_1 = arith.constant 0 : i32
    return %arg0, %c0_i32, %c0_i32_0 : i32, i32, i32
  }
  func.func @transform_10(%arg0: i32) -> (i32, i32, i32) {
    %c0_i32 = arith.constant 0 : i32
    %c0_i32_0 = arith.constant 0 : i32
    %c0_i32_1 = arith.constant 0 : i32
    return %arg0, %c0_i32, %c0_i32_0 : i32, i32, i32
  }
  func.func @transform_11(%arg0: i32) -> (i32, i32, i32) {
    %c0_i32 = arith.constant 0 : i32
    %c0_i32_0 = arith.constant 0 : i32
    %c0_i32_1 = arith.constant 0 : i32
    return %arg0, %c0_i32, %c0_i32_0 : i32, i32, i32
  }
  func.func @transform_12(%arg0: i32) -> (i32, i32, i32) {
    %c0_i32 = arith.constant 0 : i32
    %c0_i32_0 = arith.constant 0 : i32
    %c0_i32_1 = arith.constant 0 : i32
    return %arg0, %c0_i32, %c0_i32_0 : i32, i32, i32
  }
  func.func @transform_13(%arg0: i32) -> (i32, i32, i32) {
    %c0_i32 = arith.constant 0 : i32
    %c0_i32_0 = arith.constant 0 : i32
    %c0_i32_1 = arith.constant 0 : i32
    return %arg0, %c0_i32, %c0_i32_0 : i32, i32, i32
  }
  func.func @transform_14(%arg0: i32) -> (i32, i32, i32) {
    %c0_i32 = arith.constant 0 : i32
    %c0_i32_0 = arith.constant 0 : i32
    %c0_i32_1 = arith.constant 0 : i32
    return %arg0, %c0_i32, %c0_i32_0 : i32, i32, i32
  }
  func.func @transform_15(%arg0: i32) -> (i32, i32, i32) {
    %c0_i32 = arith.constant 0 : i32
    %c0_i32_0 = arith.constant 0 : i32
    %c0_i32_1 = arith.constant 0 : i32
    return %arg0, %c0_i32, %c0_i32_0 : i32, i32, i32
  }
  func.func @transform_16(%arg0: i32) -> (i32, i32) {
    %c0_i32 = arith.constant 0 : i32
    %c0_i32_0 = arith.constant 0 : i32
    %c0_i32_1 = arith.constant 0 : i32
    return %c0_i32, %c0_i32_0 : i32, i32
  }
}

</mosaic_0001>

<llo_original>
// kernel: bert_multitask_multilabel_forward.3
$region0: #{bert_multitask_multilabel_forward.3}
  #allocation0 [shape = 'u32[]', space=smem, size = 0x4, offset = 0x4, fixed_abs, tag = 'smem constant byte address 0x4 - core index']
  #allocation1 [shape = 'u32[144,128]{1,0:T(1,128)}', space=vmem, size = 0x12000, scoped, tag = 'internal scratch']
  %s0 = inlined_call_operand.vmem [shape: f32[2,32], index: 0, kind: input, shape index: {}]
  %s1 = inlined_call_operand.vmem [shape: f32[32,32], index: 1, kind: input, shape index: {}]
  %s2 = inlined_call_operand.vmem [shape: f32[1,32], index: 2, kind: input, shape index: {}]
  %s3 = inlined_call_operand.vmem [shape: f32[32,128], index: 3, kind: input, shape index: {}]
  %s4 = inlined_call_operand.vmem [shape: f32[1,128], index: 4, kind: input, shape index: {}]
  %s5 = inlined_call_operand.vmem [shape: f32[2,128], index: 5, kind: output, shape index: {0}]
  %s6 = inlined_call_operand.vmem [shape: f32[2,128], index: 6, kind: output, shape index: {1}]
  %7 = xla_tuple %s5, %s6
  %s8 = sld [smem:[#allocation0]]
  $region38: #{bert_multitask_multilabel_forward.3} parent=0
    _
  %s10 = ssub.s32 1, %s8
  %s11 = scalar_select 0, %s10, %s8
  // Predicated region
  $region2: #{bert_multitask_multilabel_forward.3} parent=0 // pred_check
    _
  $region3: #{bert_multitask_multilabel_forward.3} parent=0 // pred_check_branch
    %13 = sbr.rel (0) target = $region5
  $region4: #{bert_multitask_multilabel_forward.3} parent=0 // pred_region
    _
  $region5: #{bert_multitask_multilabel_forward.3} parent=0 // pred_fallthru
    _
  // Predicated region
  $region6: #{bert_multitask_multilabel_forward.3} parent=0 // pred_check
    _
  $region7: #{bert_multitask_multilabel_forward.3} parent=0 // pred_check_branch
    %15 = sbr.rel (0) target = $region9
  $region8: #{bert_multitask_multilabel_forward.3} parent=0 // pred_region
    _
  $region9: #{bert_multitask_multilabel_forward.3} parent=0 // pred_fallthru
    _
  // Predicated region
  $region10: #{bert_multitask_multilabel_forward.3} parent=0 // pred_check
    _
  $region11: #{bert_multitask_multilabel_forward.3} parent=0 // pred_check_branch
    %17 = sbr.rel (0) target = $region13
  $region12: #{bert_multitask_multilabel_forward.3} parent=0 // pred_region
    _
  $region13: #{bert_multitask_multilabel_forward.3} parent=0 // pred_fallthru
    _
  // Predicated region
  $region14: #{bert_multitask_multilabel_forward.3} parent=0 // pred_check
    _
  $region15: #{bert_multitask_multilabel_forward.3} parent=0 // pred_check_branch
    %19 = sbr.rel (0) target = $region17
  $region16: #{bert_multitask_multilabel_forward.3} parent=0 // pred_region
    _
  $region17: #{bert_multitask_multilabel_forward.3} parent=0 // pred_fallthru
    _
  // Predicated region
  $region18: #{bert_multitask_multilabel_forward.3} parent=0 // pred_check
    _
  $region19: #{bert_multitask_multilabel_forward.3} parent=0 // pred_check_branch
    %21 = sbr.rel (0) target = $region21
  $region20: #{bert_multitask_multilabel_forward.3} parent=0 // pred_region
    _
  $region21: #{bert_multitask_multilabel_forward.3} parent=0 // pred_fallthru
    _
  %v22 = vld [vmem:[%s0] sm:$0x3]
  %v23 = vld [vmem:[%s1] sm:$0xff]
  %v24 = vld [vmem:[%s1 + $0x8] sm:$0xff]
  %v25 = vld [vmem:[%s1 + $0x10] sm:$0xff]
  %v26 = vld [vmem:[%s1 + $0x18] sm:$0xff]
  %v27 = vld [vmem:[%s2] sm:$0x1]
  %v29 = vlaneseq
  %v30 = vshrl.u32 %v29, 7
  %v31 = vsub.s32 0, %v30
  %v32 = vrot.slane %v27, %v31
  %vm34 = vcmask 261120
  %v36 = vsel %vm34, %v22, 0
  %38 = vmatprep.subr.mxu0 0.0
  %39 = vmatpush1.msra.mxu0 0.0
  %40 = vmatprep.subr.mxu0 0.0
  %41 = vmatpush1.msra.mxu0 0.0
  %42 = vmatprep.subr.mxu0 0.0
  %43 = vmatpush1.msra.mxu0 0.0
  %44 = vmatprep.subr.mxu0 0.0
  %45 = vmatpush1.msra.mxu0 0.0
  %46 = vmatprep.subr.mxu0 0.0
  %47 = vmatpush1.msra.mxu0 0.0
  %48 = vmatprep.subr.mxu0 0.0
  %49 = vmatpush1.msra.mxu0 0.0
  %50 = vmatprep.subr.mxu0 0.0
  %51 = vmatpush1.msra.mxu0 0.0
  %52 = vmatprep.subr.mxu0 0.0
  %53 = vmatpush1.msra.mxu0 0.0
  %54 = vmatprep.subr.mxu0 0.0
  %55 = vmatpush1.msra.mxu0 0.0
  %56 = vmatprep.subr.mxu0 0.0
  %57 = vmatpush1.msra.mxu0 0.0
  %58 = vmatprep.subr.mxu0 0.0
  %59 = vmatpush1.msra.mxu0 0.0
  %60 = vmatprep.subr.mxu0 0.0
  %61 = vmatpush1.msra.mxu0 0.0
  %62 = vmatprep.subr.mxu0 0.0
  %63 = vmatpush1.msra.mxu0 %v26
  %64 = vmatprep.subr.mxu0 0.0
  %65 = vmatpush1.msra.mxu0 %v25
  %66 = vmatprep.subr.mxu0 0.0
  %67 = vmatpush1.msra.mxu0 %v24
  %68 = vmatprep.subr.mxu0 0.0
  %69 = vmatpush1.msra.mxu0 %v23
  %70 = vmatprep.subr.mxu0 0.0
  %71 = vmatpush2.msra.mxu0 0.0
  %72 = vmatprep.subr.mxu0 0.0
  %73 = vmatpush2.msra.mxu0 0.0
  %74 = vmatprep.subr.mxu0 0.0
  %75 = vmatpush2.msra.mxu0 0.0
  %76 = vmatprep.subr.mxu0 0.0
  %77 = vmatpush2.msra.mxu0 0.0
  %78 = vmatprep.subr.mxu0 0.0
  %79 = vmatpush2.msra.mxu0 0.0
  %80 = vmatprep.subr.mxu0 0.0
  %81 = vmatpush2.msra.mxu0 0.0
  %82 = vmatprep.subr.mxu0 0.0
  %83 = vmatpush2.msra.mxu0 0.0
  %84 = vmatprep.subr.mxu0 0.0
  %85 = vmatpush2.msra.mxu0 0.0
  %86 = vmatprep.subr.mxu0 0.0
  %87 = vmatpush2.msra.mxu0 0.0
  %88 = vmatprep.subr.mxu0 0.0
  %89 = vmatpush2.msra.mxu0 0.0
  %90 = vmatprep.subr.mxu0 0.0
  %91 = vmatpush2.msra.mxu0 0.0
  %92 = vmatprep.subr.mxu0 0.0
  %93 = vmatpush2.msra.mxu0 0.0
  %94 = vmatprep.subr.mxu0 0.0
  %95 = vmatpush2.msra.mxu0 0.0
  %96 = vmatprep.subr.mxu0 0.0
  %97 = vmatpush2.msra.mxu0 0.0
  %98 = vmatprep.subr.mxu0 0.0
  %99 = vmatpush2.msra.mxu0 0.0
  %100 = vmatprep.subr.mxu0 0.0
  %101 = vmatpush2.msra.mxu0 0.0
  %102 = vmatprep.mubr.f32.mxu0 0.0
  %103 = vmatmul.mubr.f32.gmra.mxu0 %v36
  %v104 = vpop.f32.mrf.mxu0
  %v105 = vadd.f32 %v32, %v104
  %v106 = vpop.f32.mrf.mxu0
  %107 = vdwg.mxu0
  %v108 = vtanh.pop %v105
  %v109 = vld [vmem:[%s3] sm:$0xff]
  %v110 = vld [vmem:[%s3 + $0x8] sm:$0xff]
  %v111 = vld [vmem:[%s3 + $0x10] sm:$0xff]
  %v112 = vld [vmem:[%s3 + $0x18] sm:$0xff]
  %v113 = vld [vmem:[%s4] sm:$0x1]
  %v115 = vlaneseq
  %v116 = vshrl.u32 %v115, 7
  %v117 = vsub.s32 0, %v116
  %v118 = vrot.slane %v113, %v117
  %v121 = vsel %vm34, %v108, 0
  %123 = vmatprep.subr.mxu0 0.0
  %124 = vmatpush1.msra.mxu0 0.0
  %125 = vmatprep.subr.mxu0 0.0
  %126 = vmatpush1.msra.mxu0 0.0
  %127 = vmatprep.subr.mxu0 0.0
  %128 = vmatpush1.msra.mxu0 0.0
  %129 = vmatprep.subr.mxu0 0.0
  %130 = vmatpush1.msra.mxu0 0.0
  %131 = vmatprep.subr.mxu0 0.0
  %132 = vmatpush1.msra.mxu0 0.0
  %133 = vmatprep.subr.mxu0 0.0
  %134 = vmatpush1.msra.mxu0 0.0
  %135 = vmatprep.subr.mxu0 0.0
  %136 = vmatpush1.msra.mxu0 0.0
  %137 = vmatprep.subr.mxu0 0.0
  %138 = vmatpush1.msra.mxu0 0.0
  %139 = vmatprep.subr.mxu0 0.0
  %140 = vmatpush1.msra.mxu0 0.0
  %141 = vmatprep.subr.mxu0 0.0
  %142 = vmatpush1.msra.mxu0 0.0
  %143 = vmatprep.subr.mxu0 0.0
  %144 = vmatpush1.msra.mxu0 0.0
  %145 = vmatprep.subr.mxu0 0.0
  %146 = vmatpush1.msra.mxu0 0.0
  %147 = vmatprep.subr.mxu0 0.0
  %148 = vmatpush1.msra.mxu0 %v112
  %149 = vmatprep.subr.mxu0 0.0
  %150 = vmatpush1.msra.mxu0 %v111
  %151 = vmatprep.subr.mxu0 0.0
  %152 = vmatpush1.msra.mxu0 %v110
  %153 = vmatprep.subr.mxu0 0.0
  %154 = vmatpush1.msra.mxu0 %v109
  %155 = vmatprep.subr.mxu0 0.0
  %156 = vmatpush2.msra.mxu0 0.0
  %157 = vmatprep.subr.mxu0 0.0
  %158 = vmatpush2.msra.mxu0 0.0
  %159 = vmatprep.subr.mxu0 0.0
  %160 = vmatpush2.msra.mxu0 0.0
  %161 = vmatprep.subr.mxu0 0.0
  %162 = vmatpush2.msra.mxu0 0.0
  %163 = vmatprep.subr.mxu0 0.0
  %164 = vmatpush2.msra.mxu0 0.0
  %165 = vmatprep.subr.mxu0 0.0
  %166 = vmatpush2.msra.mxu0 0.0
  %167 = vmatprep.subr.mxu0 0.0
  %168 = vmatpush2.msra.mxu0 0.0
  %169 = vmatprep.subr.mxu0 0.0
  %170 = vmatpush2.msra.mxu0 0.0
  %171 = vmatprep.subr.mxu0 0.0
  %172 = vmatpush2.msra.mxu0 0.0
  %173 = vmatprep.subr.mxu0 0.0
  %174 = vmatpush2.msra.mxu0 0.0
  %175 = vmatprep.subr.mxu0 0.0
  %176 = vmatpush2.msra.mxu0 0.0
  %177 = vmatprep.subr.mxu0 0.0
  %178 = vmatpush2.msra.mxu0 0.0
  %179 = vmatprep.subr.mxu0 0.0
  %180 = vmatpush2.msra.mxu0 0.0
  %181 = vmatprep.subr.mxu0 0.0
  %182 = vmatpush2.msra.mxu0 0.0
  %183 = vmatprep.subr.mxu0 0.0
  %184 = vmatpush2.msra.mxu0 0.0
  %185 = vmatprep.subr.mxu0 0.0
  %186 = vmatpush2.msra.mxu0 0.0
  %187 = vmatprep.mubr.f32.mxu0 0.0
  %188 = vmatmul.mubr.f32.gmra.mxu0 %v121
  %v189 = vpop.f32.mrf.mxu0
  %v190 = vadd.f32 %v118, %v189
  %v191 = vpop.f32.mrf.mxu0
  %192 = vdwg.mxu0
  %193 = vst [vmem:[%s5] sm:$0x3] %v190
  %v194 = vxor.u32 %v190, 2147483648
  %v195 = vmul.f32 %v194, 1.442695
  %v196 = vpow.pop %v195
  %v197 = vadd.f32 %v196, 1.0
  %v198 = vrcp.pop %v197
  %v199 = vmul.f32 1.0, %v198
  %200 = vst [vmem:[%s6] sm:$0x3] %v199
  // Predicated region
  $region22: #{bert_multitask_multilabel_forward.3} parent=0 // pred_check
    _
  $region23: #{bert_multitask_multilabel_forward.3} parent=0 // pred_check_branch
    %202 = sbr.rel (0) target = $region25
  $region24: #{bert_multitask_multilabel_forward.3} parent=0 // pred_region
    _
  $region25: #{bert_multitask_multilabel_forward.3} parent=0 // pred_fallthru
    _
  // Predicated region
  $region26: #{bert_multitask_multilabel_forward.3} parent=0 // pred_check
    _
  $region27: #{bert_multitask_multilabel_forward.3} parent=0 // pred_check_branch
    %204 = sbr.rel (0) target = $region29
  $region28: #{bert_multitask_multilabel_forward.3} parent=0 // pred_region
    _
  $region29: #{bert_multitask_multilabel_forward.3} parent=0 // pred_fallthru
    _
  // Predicated region
  $region30: #{bert_multitask_multilabel_forward.3} parent=0 // pred_check
    _
  $region31: #{bert_multitask_multilabel_forward.3} parent=0 // pred_check_branch
    %206 = sbr.rel (0) target = $region33
  $region32: #{bert_multitask_multilabel_forward.3} parent=0 // pred_region
    _
  $region33: #{bert_multitask_multilabel_forward.3} parent=0 // pred_fallthru
    _
  // Predicated region
  $region34: #{bert_multitask_multilabel_forward.3} parent=0 // pred_check
    _
  $region35: #{bert_multitask_multilabel_forward.3} parent=0 // pred_check_branch
    %208 = sbr.rel (0) target = $region37
  $region36: #{bert_multitask_multilabel_forward.3} parent=0 // pred_region
    _
  $region37: #{bert_multitask_multilabel_forward.3} parent=0 // pred_fallthru
    _

// kernel: bert_multitask_multilabel_forward.2
$region0: #{bert_multitask_multilabel_forward.2}
  #allocation0 [shape = 'u32[]', space=smem, size = 0x4, offset = 0x4, fixed_abs, tag = 'smem constant byte address 0x4 - core index']
  #allocation1 [shape = 'u32[144,128]{1,0:T(1,128)}', space=vmem, size = 0x12000, scoped, tag = 'internal scratch']
  #allocation2 [shape = 'f32[16,32]{1,0:T(8,128)}', space=vmem, size = 0x2000, scoped, tag = 'scratch operand']
  %s0 = inlined_call_operand.vmem [shape: f32[16,32], index: 0, kind: input, shape index: {}]
  %s1 = inlined_call_operand.vmem [shape: f32[2,8], index: 1, kind: input, shape index: {}]
  %s2 = inlined_call_operand.vmem [shape: f32[1,32], index: 2, kind: input, shape index: {}]
  %s3 = inlined_call_operand.vmem [shape: f32[1,32], index: 3, kind: input, shape index: {}]
  %s4 = inlined_call_operand.vmem [shape: f32[2,32,96], index: 4, kind: input, shape index: {}]
  %s5 = inlined_call_operand.vmem [shape: f32[2,1,96], index: 5, kind: input, shape index: {}]
  %s6 = inlined_call_operand.vmem [shape: f32[2,32,32], index: 6, kind: input, shape index: {}]
  %s7 = inlined_call_operand.vmem [shape: f32[2,1,32], index: 7, kind: input, shape index: {}]
  %s8 = inlined_call_operand.vmem [shape: f32[2,1,32], index: 8, kind: input, shape index: {}]
  %s9 = inlined_call_operand.vmem [shape: f32[2,1,32], index: 9, kind: input, shape index: {}]
  %s10 = inlined_call_operand.vmem [shape: f32[2,32,64], index: 10, kind: input, shape index: {}]
  %s11 = inlined_call_operand.vmem [shape: f32[2,1,64], index: 11, kind: input, shape index: {}]
  %s12 = inlined_call_operand.vmem [shape: f32[2,64,32], index: 12, kind: input, shape index: {}]
  %s13 = inlined_call_operand.vmem [shape: f32[2,1,32], index: 13, kind: input, shape index: {}]
  %s14 = inlined_call_operand.vmem [shape: f32[2,1,32], index: 14, kind: input, shape index: {}]
  %s15 = inlined_call_operand.vmem [shape: f32[2,1,32], index: 15, kind: input, shape index: {}]
  %s16 = inlined_call_operand.vmem [shape: f32[16,32], index: 16, kind: output, shape index: {}]
  %s17 = sld [smem:[#allocation0]]
  $region101: #{bert_multitask_multilabel_forward.2} parent=0
    _
  %s19 = ssub.s32 1, %s17
  %s20 = scalar_select 0, %s19, %s17
  loop: start=0, step=1, limit=4
  $region2: #{bert_multitask_multilabel_forward.2} parent=0 // loop_pre_header
    _
  $region3: #{bert_multitask_multilabel_forward.2} parent=0 // loop_header
    %s22 = sphi 0, %s26
    %p23 = scmp.ge.s32.totalorder %s22, 4
    %s30 = sphi 0, %s30
    %s32 = sphi 0, %s30
    %s33 = sphi 0, %s32
    %s47 = sphi 0, %s33
    %s51 = sphi 0, %s51
    %s53 = sphi 0, %s51
    %s54 = sphi 0, %s53
    %s68 = sphi 0, %s54
    %s72 = sphi 0, %s72
    %s74 = sphi 0, %s72
    %s75 = sphi 0, %s74
    %s89 = sphi 0, %s75
    %s93 = sphi 0, %s93
    %s95 = sphi 0, %s93
    %s96 = sphi 0, %s95
    %s110 = sphi 0, %s96
    %s116 = sphi 0, %s118
    %s119 = sphi 0, %s116
    %s120 = sphi 0, %s119
    %s136 = sphi 0, %s120
    %s142 = sphi 0, %s144
    %s145 = sphi 0, %s142
    %s146 = sphi 0, %s145
    %s162 = sphi 0, %s146
    %s168 = sphi 0, %s170
    %s171 = sphi 0, %s168
    %s172 = sphi 0, %s171
    %s188 = sphi 0, %s172
    %s194 = sphi 0, %s196
    %s197 = sphi 0, %s194
    %s198 = sphi 0, %s197
    %s214 = sphi 0, %s198
    %s220 = sphi 0, %s222
    %s223 = sphi 0, %s220
    %s224 = sphi 0, %s223
    %s240 = sphi 0, %s224
    %s246 = sphi 0, %s248
    %s249 = sphi 0, %s246
    %s250 = sphi 0, %s249
    %s266 = sphi 0, %s250
    %s272 = sphi 0, %s274
    %s275 = sphi 0, %s272
    %s276 = sphi 0, %s275
    %s292 = sphi 0, %s276
    %s298 = sphi 0, %s300
    %s301 = sphi 0, %s298
    %s302 = sphi 0, %s301
    %s318 = sphi 0, %s302
    %s324 = sphi 0, %s326
    %s327 = sphi 0, %s324
    %s328 = sphi 0, %s327
    %s344 = sphi 0, %s328
    %s350 = sphi 0, %s352
    %s353 = sphi 0, %s350
    %s354 = sphi 0, %s353
    %s370 = sphi 0, %s354
    %s376 = sphi 0, %s378
    %s379 = sphi 0, %s376
    %s380 = sphi 0, %s379
    %s396 = sphi 0, %s380
    %s402 = sphi 0, %s404
    %s405 = sphi 0, %s402
    %s406 = sphi 0, %s405
    %s422 = sphi 0, %s406
    %s426 = sphi 0, %s426
    %s428 = sphi 0, %s426
    %s429 = sphi 0, %s428
    %s443 = sphi 0, %s429
  $region4: #{bert_multitask_multilabel_forward.2} parent=0 // loop_header_branch
    %25 = sbr.rel (%p23) target = $region8
  $region5: #{bert_multitask_multilabel_forward.2} parent=0 // loop_body
    %s27 = ssub.s32 %s22, 1
    %s28 = ssub.s32 %s22, 2
    %s29 = sadd.s32 %s22, 1
    %s31 = sadd.s32 %s30, 1
    %p34 = scmp.eq.s32.totalorder %s22, 1
    %p35 = scmp.ne.s32.totalorder %s30, %s32
    %p36 = scmp.eq.s32.totalorder %s22, 0
    %p37 = por %p35, %p36
    %p38 = scmp.ne.s32.totalorder %s30, %s32
    %p39 = scmp.eq.s32.totalorder %s27, 1
    %p40 = por %p38, %p39
    %p41 = scmp.ne.s32.totalorder %s32, %s33
    %p42 = scmp.eq.s32.totalorder %s27, 0
    %p43 = por %p41, %p42
    %p44 = scmp.ne.s32.totalorder %s32, %s33
    %p45 = scmp.eq.s32.totalorder %s28, 1
    %p46 = por %p44, %p45
    %p48 = scmp.ne.s32.totalorder %s33, %s47
    %p49 = scmp.eq.s32.totalorder %s28, 0
    %p50 = por %p48, %p49
    %s52 = sadd.s32 %s51, 1
    %p55 = scmp.eq.s32.totalorder %s22, 1
    %p56 = scmp.ne.s32.totalorder %s51, %s53
    %p57 = scmp.eq.s32.totalorder %s22, 0
    %p58 = por %p56, %p57
    %p59 = scmp.ne.s32.totalorder %s51, %s53
    %p60 = scmp.eq.s32.totalorder %s27, 1
    %p61 = por %p59, %p60
    %p62 = scmp.ne.s32.totalorder %s53, %s54
    %p63 = scmp.eq.s32.totalorder %s27, 0
    %p64 = por %p62, %p63
    %p65 = scmp.ne.s32.totalorder %s53, %s54
    %p66 = scmp.eq.s32.totalorder %s28, 1
    %p67 = por %p65, %p66
    %p69 = scmp.ne.s32.totalorder %s54, %s68
    %p70 = scmp.eq.s32.totalorder %s28, 0
    %p71 = por %p69, %p70
    %s73 = sadd.s32 %s72, 1
    %p76 = scmp.eq.s32.totalorder %s22, 1
    %p77 = scmp.ne.s32.totalorder %s72, %s74
    %p78 = scmp.eq.s32.totalorder %s22, 0
    %p79 = por %p77, %p78
    %p80 = scmp.ne.s32.totalorder %s72, %s74
    %p81 = scmp.eq.s32.totalorder %s27, 1
    %p82 = por %p80, %p81
    %p83 = scmp.ne.s32.totalorder %s74, %s75
    %p84 = scmp.eq.s32.totalorder %s27, 0
    %p85 = por %p83, %p84
    %p86 = scmp.ne.s32.totalorder %s74, %s75
    %p87 = scmp.eq.s32.totalorder %s28, 1
    %p88 = por %p86, %p87
    %p90 = scmp.ne.s32.totalorder %s75, %s89
    %p91 = scmp.eq.s32.totalorder %s28, 0
    %p92 = por %p90, %p91
    %s94 = sadd.s32 %s93, 1
    %p97 = scmp.eq.s32.totalorder %s22, 1
    %p98 = scmp.ne.s32.totalorder %s93, %s95
    %p99 = scmp.eq.s32.totalorder %s22, 0
    %p100 = por %p98, %p99
    %p101 = scmp.ne.s32.totalorder %s93, %s95
    %p102 = scmp.eq.s32.totalorder %s27, 1
    %p103 = por %p101, %p102
    %p104 = scmp.ne.s32.totalorder %s95, %s96
    %p105 = scmp.eq.s32.totalorder %s27, 0
    %p106 = por %p104, %p105
    %p107 = scmp.ne.s32.totalorder %s95, %s96
    %p108 = scmp.eq.s32.totalorder %s28, 1
    %p109 = por %p107, %p108
    %p111 = scmp.ne.s32.totalorder %s96, %s110
    %p112 = scmp.eq.s32.totalorder %s28, 0
    %p113 = por %p111, %p112
    %s114 = ssub.s32 %s22, %s29
    %p115 = scmp.eq.s32.totalorder %s114, 0
    %s117 = sadd.s32 %s116, 1
    %s118 = scalar_select %p115, %s116, %s117
    %p121 = pneg %p115
    %p122 = scmp.eq.s32.totalorder %s22, 1
    %p123 = por %p121, %p122
    %p124 = scmp.ne.s32.totalorder %s116, %s119
    %p125 = scmp.eq.s32.totalorder %s22, 0
    %p126 = por %p124, %p125
    %p127 = scmp.ne.s32.totalorder %s116, %s119
    %p128 = scmp.eq.s32.totalorder %s27, 1
    %p129 = por %p127, %p128
    %p130 = scmp.ne.s32.totalorder %s119, %s120
    %p131 = scmp.eq.s32.totalorder %s27, 0
    %p132 = por %p130, %p131
    %p133 = scmp.ne.s32.totalorder %s119, %s120
    %p134 = scmp.eq.s32.totalorder %s28, 1
    %p135 = por %p133, %p134
    %p137 = scmp.ne.s32.totalorder %s120, %s136
    %p138 = scmp.eq.s32.totalorder %s28, 0
    %p139 = por %p137, %p138
    %s140 = ssub.s32 %s22, %s29
    %p141 = scmp.eq.s32.totalorder %s140, 0
    %s143 = sadd.s32 %s142, 1
    %s144 = scalar_select %p141, %s142, %s143
    %p147 = pneg %p141
    %p148 = scmp.eq.s32.totalorder %s22, 1
    %p149 = por %p147, %p148
    %p150 = scmp.ne.s32.totalorder %s142, %s145
    %p151 = scmp.eq.s32.totalorder %s22, 0
    %p152 = por %p150, %p151
    %p153 = scmp.ne.s32.totalorder %s142, %s145
    %p154 = scmp.eq.s32.totalorder %s27, 1
    %p155 = por %p153, %p154
    %p156 = scmp.ne.s32.totalorder %s145, %s146
    %p157 = scmp.eq.s32.totalorder %s27, 0
    %p158 = por %p156, %p157
    %p159 = scmp.ne.s32.totalorder %s145, %s146
    %p160 = scmp.eq.s32.totalorder %s28, 1
    %p161 = por %p159, %p160
    %p163 = scmp.ne.s32.totalorder %s146, %s162
    %p164 = scmp.eq.s32.totalorder %s28, 0
    %p165 = por %p163, %p164
    %s166 = ssub.s32 %s22, %s29
    %p167 = scmp.eq.s32.totalorder %s166, 0
    %s169 = sadd.s32 %s168, 1
    %s170 = scalar_select %p167, %s168, %s169
    %p173 = pneg %p167
    %p174 = scmp.eq.s32.totalorder %s22, 1
    %p175 = por %p173, %p174
    %p176 = scmp.ne.s32.totalorder %s168, %s171
    %p177 = scmp.eq.s32.totalorder %s22, 0
    %p178 = por %p176, %p177
    %p179 = scmp.ne.s32.totalorder %s168, %s171
    %p180 = scmp.eq.s32.totalorder %s27, 1
    %p181 = por %p179, %p180
    %p182 = scmp.ne.s32.totalorder %s171, %s172
    %p183 = scmp.eq.s32.totalorder %s27, 0
    %p184 = por %p182, %p183
    %p185 = scmp.ne.s32.totalorder %s171, %s172
    %p186 = scmp.eq.s32.totalorder %s28, 1
    %p187 = por %p185, %p186
    %p189 = scmp.ne.s32.totalorder %s172, %s188
    %p190 = scmp.eq.s32.totalorder %s28, 0
    %p191 = por %p189, %p190
    %s192 = ssub.s32 %s22, %s29
    %p193 = scmp.eq.s32.totalorder %s192, 0
    %s195 = sadd.s32 %s194, 1
    %s196 = scalar_select %p193, %s194, %s195
    %p199 = pneg %p193
    %p200 = scmp.eq.s32.totalorder %s22, 1
    %p201 = por %p199, %p200
    %p202 = scmp.ne.s32.totalorder %s194, %s197
    %p203 = scmp.eq.s32.totalorder %s22, 0
    %p204 = por %p202, %p203
    %p205 = scmp.ne.s32.totalorder %s194, %s197
    %p206 = scmp.eq.s32.totalorder %s27, 1
    %p207 = por %p205, %p206
    %p208 = scmp.ne.s32.totalorder %s197, %s198
    %p209 = scmp.eq.s32.totalorder %s27, 0
    %p210 = por %p208, %p209
    %p211 = scmp.ne.s32.totalorder %s197, %s198
    %p212 = scmp.eq.s32.totalorder %s28, 1
    %p213 = por %p211, %p212
    %p215 = scmp.ne.s32.totalorder %s198, %s214
    %p216 = scmp.eq.s32.totalorder %s28, 0
    %p217 = por %p215, %p216
    %s218 = ssub.s32 %s22, %s29
    %p219 = scmp.eq.s32.totalorder %s218, 0
    %s221 = sadd.s32 %s220, 1
    %s222 = scalar_select %p219, %s220, %s221
    %p225 = pneg %p219
    %p226 = scmp.eq.s32.totalorder %s22, 1
    %p227 = por %p225, %p226
    %p228 = scmp.ne.s32.totalorder %s220, %s223
    %p229 = scmp.eq.s32.totalorder %s22, 0
    %p230 = por %p228, %p229
    %p231 = scmp.ne.s32.totalorder %s220, %s223
    %p232 = scmp.eq.s32.totalorder %s27, 1
    %p233 = por %p231, %p232
    %p234 = scmp.ne.s32.totalorder %s223, %s224
    %p235 = scmp.eq.s32.totalorder %s27, 0
    %p236 = por %p234, %p235
    %p237 = scmp.ne.s32.totalorder %s223, %s224
    %p238 = scmp.eq.s32.totalorder %s28, 1
    %p239 = por %p237, %p238
    %p241 = scmp.ne.s32.totalorder %s224, %s240
    %p242 = scmp.eq.s32.totalorder %s28, 0
    %p243 = por %p241, %p242
    %s244 = ssub.s32 %s22, %s29
    %p245 = scmp.eq.s32.totalorder %s244, 0
    %s247 = sadd.s32 %s246, 1
    %s248 = scalar_select %p245, %s246, %s247
    %p251 = pneg %p245
    %p252 = scmp.eq.s32.totalorder %s22, 1
    %p253 = por %p251, %p252
    %p254 = scmp.ne.s32.totalorder %s246, %s249
    %p255 = scmp.eq.s32.totalorder %s22, 0
    %p256 = por %p254, %p255
    %p257 = scmp.ne.s32.totalorder %s246, %s249
    %p258 = scmp.eq.s32.totalorder %s27, 1
    %p259 = por %p257, %p258
    %p260 = scmp.ne.s32.totalorder %s249, %s250
    %p261 = scmp.eq.s32.totalorder %s27, 0
    %p262 = por %p260, %p261
    %p263 = scmp.ne.s32.totalorder %s249, %s250
    %p264 = scmp.eq.s32.totalorder %s28, 1
    %p265 = por %p263, %p264
    %p267 = scmp.ne.s32.totalorder %s250, %s266
    %p268 = scmp.eq.s32.totalorder %s28, 0
    %p269 = por %p267, %p268
    %s270 = ssub.s32 %s22, %s29
    %p271 = scmp.eq.s32.totalorder %s270, 0
    %s273 = sadd.s32 %s272, 1
    %s274 = scalar_select %p271, %s272, %s273
    %p277 = pneg %p271
    %p278 = scmp.eq.s32.totalorder %s22, 1
    %p279 = por %p277, %p278
    %p280 = scmp.ne.s32.totalorder %s272, %s275
    %p281 = scmp.eq.s32.totalorder %s22, 0
    %p282 = por %p280, %p281
    %p283 = scmp.ne.s32.totalorder %s272, %s275
    %p284 = scmp.eq.s32.totalorder %s27, 1
    %p285 = por %p283, %p284
    %p286 = scmp.ne.s32.totalorder %s275, %s276
    %p287 = scmp.eq.s32.totalorder %s27, 0
    %p288 = por %p286, %p287
    %p289 = scmp.ne.s32.totalorder %s275, %s276
    %p290 = scmp.eq.s32.totalorder %s28, 1
    %p291 = por %p289, %p290
    %p293 = scmp.ne.s32.totalorder %s276, %s292
    %p294 = scmp.eq.s32.totalorder %s28, 0
    %p295 = por %p293, %p294
    %s296 = ssub.s32 %s22, %s29
    %p297 = scmp.eq.s32.totalorder %s296, 0
    %s299 = sadd.s32 %s298, 1
    %s300 = scalar_select %p297, %s298, %s299
    %p303 = pneg %p297
    %p304 = scmp.eq.s32.totalorder %s22, 1
    %p305 = por %p303, %p304
    %p306 = scmp.ne.s32.totalorder %s298, %s301
    %p307 = scmp.eq.s32.totalorder %s22, 0
    %p308 = por %p306, %p307
    %p309 = scmp.ne.s32.totalorder %s298, %s301
    %p310 = scmp.eq.s32.totalorder %s27, 1
    %p311 = por %p309, %p310
    %p312 = scmp.ne.s32.totalorder %s301, %s302
    %p313 = scmp.eq.s32.totalorder %s27, 0
    %p314 = por %p312, %p313
    %p315 = scmp.ne.s32.totalorder %s301, %s302
    %p316 = scmp.eq.s32.totalorder %s28, 1
    %p317 = por %p315, %p316
    %p319 = scmp.ne.s32.totalorder %s302, %s318
    %p320 = scmp.eq.s32.totalorder %s28, 0
    %p321 = por %p319, %p320
    %s322 = ssub.s32 %s22, %s29
    %p323 = scmp.eq.s32.totalorder %s322, 0
    %s325 = sadd.s32 %s324, 1
    %s326 = scalar_select %p323, %s324, %s325
    %p329 = pneg %p323
    %p330 = scmp.eq.s32.totalorder %s22, 1
    %p331 = por %p329, %p330
    %p332 = scmp.ne.s32.totalorder %s324, %s327
    %p333 = scmp.eq.s32.totalorder %s22, 0
    %p334 = por %p332, %p333
    %p335 = scmp.ne.s32.totalorder %s324, %s327
    %p336 = scmp.eq.s32.totalorder %s27, 1
    %p337 = por %p335, %p336
    %p338 = scmp.ne.s32.totalorder %s327, %s328
    %p339 = scmp.eq.s32.totalorder %s27, 0
    %p340 = por %p338, %p339
    %p341 = scmp.ne.s32.totalorder %s327, %s328
    %p342 = scmp.eq.s32.totalorder %s28, 1
    %p343 = por %p341, %p342
    %p345 = scmp.ne.s32.totalorder %s328, %s344
    %p346 = scmp.eq.s32.totalorder %s28, 0
    %p347 = por %p345, %p346
    %s348 = ssub.s32 %s22, %s29
    %p349 = scmp.eq.s32.totalorder %s348, 0
    %s351 = sadd.s32 %s350, 1
    %s352 = scalar_select %p349, %s350, %s351
    %p355 = pneg %p349
    %p356 = scmp.eq.s32.totalorder %s22, 1
    %p357 = por %p355, %p356
    %p358 = scmp.ne.s32.totalorder %s350, %s353
    %p359 = scmp.eq.s32.totalorder %s22, 0
    %p360 = por %p358, %p359
    %p361 = scmp.ne.s32.totalorder %s350, %s353
    %p362 = scmp.eq.s32.totalorder %s27, 1
    %p363 = por %p361, %p362
    %p364 = scmp.ne.s32.totalorder %s353, %s354
    %p365 = scmp.eq.s32.totalorder %s27, 0
    %p366 = por %p364, %p365
    %p367 = scmp.ne.s32.totalorder %s353, %s354
    %p368 = scmp.eq.s32.totalorder %s28, 1
    %p369 = por %p367, %p368
    %p371 = scmp.ne.s32.totalorder %s354, %s370
    %p372 = scmp.eq.s32.totalorder %s28, 0
    %p373 = por %p371, %p372
    %s374 = ssub.s32 %s22, %s29
    %p375 = scmp.eq.s32.totalorder %s374, 0
    %s377 = sadd.s32 %s376, 1
    %s378 = scalar_select %p375, %s376, %s377
    %p381 = pneg %p375
    %p382 = scmp.eq.s32.totalorder %s22, 1
    %p383 = por %p381, %p382
    %p384 = scmp.ne.s32.totalorder %s376, %s379
    %p385 = scmp.eq.s32.totalorder %s22, 0
    %p386 = por %p384, %p385
    %p387 = scmp.ne.s32.totalorder %s376, %s379
    %p388 = scmp.eq.s32.totalorder %s27, 1
    %p389 = por %p387, %p388
    %p390 = scmp.ne.s32.totalorder %s379, %s380
    %p391 = scmp.eq.s32.totalorder %s27, 0
    %p392 = por %p390, %p391
    %p393 = scmp.ne.s32.totalorder %s379, %s380
    %p394 = scmp.eq.s32.totalorder %s28, 1
    %p395 = por %p393, %p394
    %p397 = scmp.ne.s32.totalorder %s380, %s396
    %p398 = scmp.eq.s32.totalorder %s28, 0
    %p399 = por %p397, %p398
    %s400 = ssub.s32 %s22, %s29
    %p401 = scmp.eq.s32.totalorder %s400, 0
    %s403 = sadd.s32 %s402, 1
    %s404 = scalar_select %p401, %s402, %s403
    %p407 = pneg %p401
    %p408 = scmp.eq.s32.totalorder %s22, 1
    %p409 = por %p407, %p408
    %p410 = scmp.ne.s32.totalorder %s402, %s405
    %p411 = scmp.eq.s32.totalorder %s22, 0
    %p412 = por %p410, %p411
    %p413 = scmp.ne.s32.totalorder %s402, %s405
    %p414 = scmp.eq.s32.totalorder %s27, 1
    %p415 = por %p413, %p414
    %p416 = scmp.ne.s32.totalorder %s405, %s406
    %p417 = scmp.eq.s32.totalorder %s27, 0
    %p418 = por %p416, %p417
    %p419 = scmp.ne.s32.totalorder %s405, %s406
    %p420 = scmp.eq.s32.totalorder %s28, 1
    %p421 = por %p419, %p420
    %p423 = scmp.ne.s32.totalorder %s406, %s422
    %p424 = scmp.eq.s32.totalorder %s28, 0
    %p425 = por %p423, %p424
    %s427 = sadd.s32 %s426, 1
    %p430 = scmp.eq.s32.totalorder %s22, 1
    %p431 = scmp.ne.s32.totalorder %s426, %s428
    %p432 = scmp.eq.s32.totalorder %s22, 0
    %p433 = por %p431, %p432
    %p434 = scmp.ne.s32.totalorder %s426, %s428
    %p435 = scmp.eq.s32.totalorder %s27, 1
    %p436 = por %p434, %p435
    %p437 = scmp.ne.s32.totalorder %s428, %s429
    %p438 = scmp.eq.s32.totalorder %s27, 0
    %p439 = por %p437, %p438
    %p440 = scmp.ne.s32.totalorder %s428, %s429
    %p441 = scmp.eq.s32.totalorder %s28, 1
    %p442 = por %p440, %p441
    %p444 = scmp.ne.s32.totalorder %s429, %s443
    %p445 = scmp.eq.s32.totalorder %s28, 0
    %p446 = por %p444, %p445
    %p447 = scmp.le.s32.totalorder 1, %s22
    %p448 = scmp.lt.s32.totalorder %s22, 3
    %p449 = pnand %p447, %p448
    %p450 = pneg %p449
    // Predicated region
    $region9: #{bert_multitask_multilabel_forward.2} parent=5 // pred_check
      _
    $region10: #{bert_multitask_multilabel_forward.2} parent=5 // pred_check_branch
      %452 = sbr.rel (%p449) target = $region12
    $region11: #{bert_multitask_multilabel_forward.2} parent=5 // pred_region
      %s453 = ssub.s32 %s22, 1
      // Predicated region
      $region13: #{bert_multitask_multilabel_forward.2} parent=11 // pred_check
        %p454 = pneg %p43
      $region14: #{bert_multitask_multilabel_forward.2} parent=11 // pred_check_branch
        %456 = sbr.rel (%p454) target = $region16
      $region15: #{bert_multitask_multilabel_forward.2} parent=11 // pred_region
        _
      $region16: #{bert_multitask_multilabel_forward.2} parent=11 // pred_fallthru
        _
      // Predicated region
      $region17: #{bert_multitask_multilabel_forward.2} parent=11 // pred_check
        %p457 = pneg %p64
      $region18: #{bert_multitask_multilabel_forward.2} parent=11 // pred_check_branch
        %459 = sbr.rel (%p457) target = $region20
      $region19: #{bert_multitask_multilabel_forward.2} parent=11 // pred_region
        _
      $region20: #{bert_multitask_multilabel_forward.2} parent=11 // pred_fallthru
        _
      // Predicated region
      $region21: #{bert_multitask_multilabel_forward.2} parent=11 // pred_check
        %p460 = pneg %p85
      $region22: #{bert_multitask_multilabel_forward.2} parent=11 // pred_check_branch
        %462 = sbr.rel (%p460) target = $region24
      $region23: #{bert_multitask_multilabel_forward.2} parent=11 // pred_region
        _
      $region24: #{bert_multitask_multilabel_forward.2} parent=11 // pred_fallthru
        _
      // Predicated region
      $region25: #{bert_multitask_multilabel_forward.2} parent=11 // pred_check
        %p463 = pneg %p106
      $region26: #{bert_multitask_multilabel_forward.2} parent=11 // pred_check_branch
        %465 = sbr.rel (%p463) target = $region28
      $region27: #{bert_multitask_multilabel_forward.2} parent=11 // pred_region
        _
      $region28: #{bert_multitask_multilabel_forward.2} parent=11 // pred_fallthru
        _
    $region12: #{bert_multitask_multilabel_forward.2} parent=5 // pred_fallthru
      _
    %p466 = scmp.lt.s32.totalorder %s22, 2
    // Predicated region
    $region29: #{bert_multitask_multilabel_forward.2} parent=5 // pred_check
      %p467 = pneg %p466
    $region30: #{bert_multitask_multilabel_forward.2} parent=5 // pred_check_branch
      %469 = sbr.rel (%p467) target = $region32
    $region31: #{bert_multitask_multilabel_forward.2} parent=5 // pred_region
      // Predicated region
      $region33: #{bert_multitask_multilabel_forward.2} parent=31 // pred_check
        %p470 = pneg %p126
      $region34: #{bert_multitask_multilabel_forward.2} parent=31 // pred_check_branch
        %472 = sbr.rel (%p470) target = $region36
      $region35: #{bert_multitask_multilabel_forward.2} parent=31 // pred_region
        %p473 = scmp.lt.s32.totalorder %s22, 1
        %s474 = scalar_select %p473, %s22, 1
        %s475 = smul.addr %s474, 4
        %s476 = smul.addr %s475, 8
        %s477 = scalar_lea.vmem %s4, %s476
      $region36: #{bert_multitask_multilabel_forward.2} parent=31 // pred_fallthru
        _
      // Predicated region
      $region37: #{bert_multitask_multilabel_forward.2} parent=31 // pred_check
        %p478 = pneg %p152
      $region38: #{bert_multitask_multilabel_forward.2} parent=31 // pred_check_branch
        %480 = sbr.rel (%p478) target = $region40
      $region39: #{bert_multitask_multilabel_forward.2} parent=31 // pred_region
        %p481 = scmp.lt.s32.totalorder %s22, 1
        %s482 = scalar_select %p481, %s22, 1
        %s483 = scalar_lea.vmem %s5, %s482
      $region40: #{bert_multitask_multilabel_forward.2} parent=31 // pred_fallthru
        _
      // Predicated region
      $region41: #{bert_multitask_multilabel_forward.2} parent=31 // pred_check
        %p484 = pneg %p178
      $region42: #{bert_multitask_multilabel_forward.2} parent=31 // pred_check_branch
        %486 = sbr.rel (%p484) target = $region44
      $region43: #{bert_multitask_multilabel_forward.2} parent=31 // pred_region
        %p487 = scmp.lt.s32.totalorder %s22, 1
        %s488 = scalar_select %p487, %s22, 1
        %s489 = smul.addr %s488, 4
        %s490 = smul.addr %s489, 8
        %s491 = scalar_lea.vmem %s6, %s490
      $region44: #{bert_multitask_multilabel_forward.2} parent=31 // pred_fallthru
        _
      // Predicated region
      $region45: #{bert_multitask_multilabel_forward.2} parent=31 // pred_check
        %p492 = pneg %p204
      $region46: #{bert_multitask_multilabel_forward.2} parent=31 // pred_check_branch
        %494 = sbr.rel (%p492) target = $region48
      $region47: #{bert_multitask_multilabel_forward.2} parent=31 // pred_region
        %p495 = scmp.lt.s32.totalorder %s22, 1
        %s496 = scalar_select %p495, %s22, 1
        %s497 = scalar_lea.vmem %s7, %s496
      $region48: #{bert_multitask_multilabel_forward.2} parent=31 // pred_fallthru
        _
      // Predicated region
      $region49: #{bert_multitask_multilabel_forward.2} parent=31 // pred_check
        %p498 = pneg %p230
      $region50: #{bert_multitask_multilabel_forward.2} parent=31 // pred_check_branch
        %500 = sbr.rel (%p498) target = $region52
      $region51: #{bert_multitask_multilabel_forward.2} parent=31 // pred_region
        %p501 = scmp.lt.s32.totalorder %s22, 1
        %s502 = scalar_select %p501, %s22, 1
        %s503 = scalar_lea.vmem %s8, %s502
      $region52: #{bert_multitask_multilabel_forward.2} parent=31 // pred_fallthru
        _
      // Predicated region
      $region53: #{bert_multitask_multilabel_forward.2} parent=31 // pred_check
        %p504 = pneg %p256
      $region54: #{bert_multitask_multilabel_forward.2} parent=31 // pred_check_branch
        %506 = sbr.rel (%p504) target = $region56
      $region55: #{bert_multitask_multilabel_forward.2} parent=31 // pred_region
        %p507 = scmp.lt.s32.totalorder %s22, 1
        %s508 = scalar_select %p507, %s22, 1
        %s509 = scalar_lea.vmem %s9, %s508
      $region56: #{bert_multitask_multilabel_forward.2} parent=31 // pred_fallthru
        _
      // Predicated region
      $region57: #{bert_multitask_multilabel_forward.2} parent=31 // pred_check
        %p510 = pneg %p282
      $region58: #{bert_multitask_multilabel_forward.2} parent=31 // pred_check_branch
        %512 = sbr.rel (%p510) target = $region60
      $region59: #{bert_multitask_multilabel_forward.2} parent=31 // pred_region
        %p513 = scmp.lt.s32.totalorder %s22, 1
        %s514 = scalar_select %p513, %s22, 1
        %s515 = smul.addr %s514, 4
        %s516 = smul.addr %s515, 8
        %s517 = scalar_lea.vmem %s10, %s516
      $region60: #{bert_multitask_multilabel_forward.2} parent=31 // pred_fallthru
        _
      // Predicated region
      $region61: #{bert_multitask_multilabel_forward.2} parent=31 // pred_check
        %p518 = pneg %p308
      $region62: #{bert_multitask_multilabel_forward.2} parent=31 // pred_check_branch
        %520 = sbr.rel (%p518) target = $region64
      $region63: #{bert_multitask_multilabel_forward.2} parent=31 // pred_region
        %p521 = scmp.lt.s32.totalorder %s22, 1
        %s522 = scalar_select %p521, %s22, 1
        %s523 = scalar_lea.vmem %s11, %s522
      $region64: #{bert_multitask_multilabel_forward.2} parent=31 // pred_fallthru
        _
      // Predicated region
      $region65: #{bert_multitask_multilabel_forward.2} parent=31 // pred_check
        %p524 = pneg %p334
      $region66: #{bert_multitask_multilabel_forward.2} parent=31 // pred_check_branch
        %526 = sbr.rel (%p524) target = $region68
      $region67: #{bert_multitask_multilabel_forward.2} parent=31 // pred_region
        %p527 = scmp.lt.s32.totalorder %s22, 1
        %s528 = scalar_select %p527, %s22, 1
        %s529 = smul.addr %s528, 8
        %s530 = smul.addr %s529, 8
        %s531 = scalar_lea.vmem %s12, %s530
      $region68: #{bert_multitask_multilabel_forward.2} parent=31 // pred_fallthru
        _
      // Predicated region
      $region69: #{bert_multitask_multilabel_forward.2} parent=31 // pred_check
        %p532 = pneg %p360
      $region70: #{bert_multitask_multilabel_forward.2} parent=31 // pred_check_branch
        %534 = sbr.rel (%p532) target = $region72
      $region71: #{bert_multitask_multilabel_forward.2} parent=31 // pred_region
        %p535 = scmp.lt.s32.totalorder %s22, 1
        %s536 = scalar_select %p535, %s22, 1
        %s537 = scalar_lea.vmem %s13, %s536
      $region72: #{bert_multitask_multilabel_forward.2} parent=31 // pred_fallthru
        _
      // Predicated region
      $region73: #{bert_multitask_multilabel_forward.2} parent=31 // pred_check
        %p538 = pneg %p386
      $region74: #{bert_multitask_multilabel_forward.2} parent=31 // pred_check_branch
        %540 = sbr.rel (%p538) target = $region76
      $region75: #{bert_multitask_multilabel_forward.2} parent=31 // pred_region
        %p541 = scmp.lt.s32.totalorder %s22, 1
        %s542 = scalar_select %p541, %s22, 1
        %s543 = scalar_lea.vmem %s14, %s542
      $region76: #{bert_multitask_multilabel_forward.2} parent=31 // pred_fallthru
        _
      // Predicated region
      $region77: #{bert_multitask_multilabel_forward.2} parent=31 // pred_check
        %p544 = pneg %p412
      $region78: #{bert_multitask_multilabel_forward.2} parent=31 // pred_check_branch
        %546 = sbr.rel (%p544) target = $region80
      $region79: #{bert_multitask_multilabel_forward.2} parent=31 // pred_region
        %p547 = scmp.lt.s32.totalorder %s22, 1
        %s548 = scalar_select %p547, %s22, 1
        %s549 = scalar_lea.vmem %s15, %s548
      $region80: #{bert_multitask_multilabel_forward.2} parent=31 // pred_fallthru
        _
    $region32: #{bert_multitask_multilabel_forward.2} parent=5 // pred_fallthru
      _
    %p550 = scmp.le.s32.totalorder 1, %s22
    %p551 = scmp.lt.s32.totalorder %s22, 3
    %p552 = pnand %p550, %p551
    %p553 = pneg %p552
    // Predicated region
    $region81: #{bert_multitask_multilabel_forward.2} parent=5 // pred_check
      _
    $region82: #{bert_multitask_multilabel_forward.2} parent=5 // pred_check_branch
      %555 = sbr.rel (%p552) target = $region84
    $region83: #{bert_multitask_multilabel_forward.2} parent=5 // pred_region
      %s556 = ssub.s32 %s22, 1
      %p557 = pneg %p43
      %p558 = pneg %p40
      %p559 = pneg %p64
      %p560 = pneg %p61
      %p561 = pneg %p85
      %p562 = pneg %p82
      %p563 = pneg %p106
      %p564 = pneg %p103
      %p565 = scmp.lt.s32.totalorder %s27, 1
      %s566 = scalar_select %p565, %s27, 1
      %s567 = smul.addr %s566, 4
      %s568 = smul.addr %s567, 8
      %s569 = scalar_lea.vmem %s4, %s568
      %p570 = pneg %p132
      %p571 = pneg %p129
      %p572 = scmp.lt.s32.totalorder %s27, 1
      %s573 = scalar_select %p572, %s27, 1
      %s574 = scalar_lea.vmem %s5, %s573
      %p575 = pneg %p158
      %p576 = pneg %p155
      %p577 = scmp.lt.s32.totalorder %s27, 1
      %s578 = scalar_select %p577, %s27, 1
      %s579 = smul.addr %s578, 4
      %s580 = smul.addr %s579, 8
      %s581 = scalar_lea.vmem %s6, %s580
      %p582 = pneg %p184
      %p583 = pneg %p181
      %p584 = scmp.lt.s32.totalorder %s27, 1
      %s585 = scalar_select %p584, %s27, 1
      %s586 = scalar_lea.vmem %s7, %s585
      %p587 = pneg %p210
      %p588 = pneg %p207
      %p589 = scmp.lt.s32.totalorder %s27, 1
      %s590 = scalar_select %p589, %s27, 1
      %s591 = scalar_lea.vmem %s8, %s590
      %p592 = pneg %p236
      %p593 = pneg %p233
      %p594 = scmp.lt.s32.totalorder %s27, 1
      %s595 = scalar_select %p594, %s27, 1
      %s596 = scalar_lea.vmem %s9, %s595
      %p597 = pneg %p262
      %p598 = pneg %p259
      %p599 = scmp.lt.s32.totalorder %s27, 1
      %s600 = scalar_select %p599, %s27, 1
      %s601 = smul.addr %s600, 4
      %s602 = smul.addr %s601, 8
      %s603 = scalar_lea.vmem %s10, %s602
      %p604 = pneg %p288
      %p605 = pneg %p285
      %p606 = scmp.lt.s32.totalorder %s27, 1
      %s607 = scalar_select %p606, %s27, 1
      %s608 = scalar_lea.vmem %s11, %s607
      %p609 = pneg %p314
      %p610 = pneg %p311
      %p611 = scmp.lt.s32.totalorder %s27, 1
      %s612 = scalar_select %p611, %s27, 1
      %s613 = smul.addr %s612, 8
      %s614 = smul.addr %s613, 8
      %s615 = scalar_lea.vmem %s12, %s614
      %p616 = pneg %p340
      %p617 = pneg %p337
      %p618 = scmp.lt.s32.totalorder %s27, 1
      %s619 = scalar_select %p618, %s27, 1
      %s620 = scalar_lea.vmem %s13, %s619
      %p621 = pneg %p366
      %p622 = pneg %p363
      %p623 = scmp.lt.s32.totalorder %s27, 1
      %s624 = scalar_select %p623, %s27, 1
      %s625 = scalar_lea.vmem %s14, %s624
      %p626 = pneg %p392
      %p627 = pneg %p389
      %p628 = scmp.lt.s32.totalorder %s27, 1
      %s629 = scalar_select %p628, %s27, 1
      %s630 = scalar_lea.vmem %s15, %s629
      %p631 = pneg %p418
      %p632 = pneg %p415
      %p633 = pneg %p439
      %p634 = pneg %p436
      %p635 = scmp.lt.s32.totalorder %s27, 1
      %s636 = scalar_select %p635, %s27, 1
      %s637 = smul.addr %s636, 4
      %s638 = smul.addr %s637, 8
      %s639 = scalar_lea.vmem %s4, %s638
      %p640 = scmp.lt.s32.totalorder %s27, 1
      %s641 = scalar_select %p640, %s27, 1
      %s642 = scalar_lea.vmem %s5, %s641
      %p643 = scmp.lt.s32.totalorder %s27, 1
      %s644 = scalar_select %p643, %s27, 1
      %s645 = smul.addr %s644, 4
      %s646 = smul.addr %s645, 8
      %s647 = scalar_lea.vmem %s6, %s646
      %p648 = scmp.lt.s32.totalorder %s27, 1
      %s649 = scalar_select %p648, %s27, 1
      %s650 = scalar_lea.vmem %s7, %s649
      %p651 = scmp.lt.s32.totalorder %s27, 1
      %s652 = scalar_select %p651, %s27, 1
      %s653 = scalar_lea.vmem %s8, %s652
      %p654 = scmp.lt.s32.totalorder %s27, 1
      %s655 = scalar_select %p654, %s27, 1
      %s656 = scalar_lea.vmem %s9, %s655
      %p657 = scmp.lt.s32.totalorder %s27, 1
      %s658 = scalar_select %p657, %s27, 1
      %s659 = smul.addr %s658, 4
      %s660 = smul.addr %s659, 8
      %s661 = scalar_lea.vmem %s10, %s660
      %p662 = scmp.lt.s32.totalorder %s27, 1
      %s663 = scalar_select %p662, %s27, 1
      %s664 = scalar_lea.vmem %s11, %s663
      %p665 = scmp.lt.s32.totalorder %s27, 1
      %s666 = scalar_select %p665, %s27, 1
      %s667 = smul.addr %s666, 8
      %s668 = smul.addr %s667, 8
      %s669 = scalar_lea.vmem %s12, %s668
      %p670 = scmp.lt.s32.totalorder %s27, 1
      %s671 = scalar_select %p670, %s27, 1
      %s672 = scalar_lea.vmem %s13, %s671
      %p673 = scmp.lt.s32.totalorder %s27, 1
      %s674 = scalar_select %p673, %s27, 1
      %s675 = scalar_lea.vmem %s14, %s674
      %p676 = scmp.lt.s32.totalorder %s27, 1
      %s677 = scalar_select %p676, %s27, 1
      %s678 = scalar_lea.vmem %s15, %s677
      %p679 = scmp.eq.s32.totalorder %s27, 0
      // Predicated region
      $region85: #{bert_multitask_multilabel_forward.2} parent=83 // pred_check
        %p680 = pneg %p679
      $region86: #{bert_multitask_multilabel_forward.2} parent=83 // pred_check_branch
        %682 = sbr.rel (%p680) target = $region88
      $region87: #{bert_multitask_multilabel_forward.2} parent=83 // pred_region
        %v683 = vld [vmem:[%s0] sm:$0xff]
        %v684 = vld [vmem:[%s0 + $0x8] sm:$0xff]
        %v685 = vld [vmem:[%s2] sm:$0x1]
        %v686 = vld [vmem:[%s3] sm:$0x1]
        %vm687 = vcmask 261120
        %v688 = vsel %vm687, %v683, 0.0
        %689 = vadd.xlane.f32.xlu0 %v688
        %v690 = vpop.xlane.xlu0 %689
        %v691 = vsel %vm687, %v684, 0.0
        %692 = vadd.xlane.f32.xlu0 %v691
        %v693 = vpop.xlane.xlu0 %692
        %v694 = vrcp.pop 32.0
        %v695 = vmul.f32 %v690, %v694
        %v696 = vmul.f32 %v693, %v694
        %v697 = vsub.f32 %v683, %v695
        %v698 = vsub.f32 %v684, %v696
        %v699 = vmul.f32 %v697, %v697
        %v700 = vmul.f32 %v698, %v698
        %v701 = vsel %vm687, %v699, 0.0
        %702 = vadd.xlane.f32.xlu0 %v701
        %v703 = vpop.xlane.xlu0 %702
        %v704 = vsel %vm687, %v700, 0.0
        %705 = vadd.xlane.f32.xlu0 %v704
        %v706 = vpop.xlane.xlu0 %705
        %v707 = vmul.f32 %v703, %v694
        %v708 = vmul.f32 %v706, %v694
        %v709 = vadd.f32 %v707, 1e-12
        %v710 = vadd.f32 %v708, 1e-12
        %v711 = vrsqrt.pop %v709
        %v712 = vrsqrt.pop %v710
        %v713 = vmul.f32 %v697, %v711
        %v714 = vmul.f32 %v698, %v712
        %v716 = vlaneseq
        %v717 = vshrl.u32 %v716, 7
        %v718 = vsub.s32 0, %v717
        %v719 = vrot.slane %v685, %v718
        %v721 = vmul.f32 %v713, %v719
        %v722 = vmul.f32 %v714, %v719
        %v724 = vlaneseq
        %v725 = vshrl.u32 %v724, 7
        %v726 = vsub.s32 0, %v725
        %v727 = vrot.slane %v686, %v726
        %v729 = vadd.f32 %v721, %v727
        %v730 = vadd.f32 %v722, %v727
        %731 = vst.msk [vmem:[#allocation2] sm:$0xff] %vm687, %v729
        %732 = vst.msk [vmem:[#allocation2 + $0x8] sm:$0xff] %vm687, %v730
      $region88: #{bert_multitask_multilabel_forward.2} parent=83 // pred_fallthru
        _
      %v733 = vld [vmem:[#allocation2] sm:$0xff]
      %v734 = vld [vmem:[#allocation2 + $0x8] sm:$0xff]
      %v735 = vld [vmem:[%s639] sm:$0xff]
      %v736 = vld [vmem:[%s639 + $0x8] sm:$0xff]
      %v737 = vld [vmem:[%s639 + $0x10] sm:$0xff]
      %v738 = vld [vmem:[%s639 + $0x18] sm:$0xff]
      %v739 = vld [vmem:[%s642] sm:$0x1]
      %v741 = vlaneseq
      %v742 = vshrl.u32 %v741, 7
      %v743 = vsub.s32 0, %v742
      %v744 = vrot.slane %v739, %v743
      %vm746 = vcmask 261120
      %v748 = vsel %vm746, %v733, 0
      %v751 = vsel %vm746, %v734, 0
      %753 = vmatprep.subr.mxu0 0.0
      %754 = vmatpush1.msra.mxu0 0.0
      %755 = vmatprep.subr.mxu0 0.0
      %756 = vmatpush1.msra.mxu0 0.0
      %757 = vmatprep.subr.mxu0 0.0
      %758 = vmatpush1.msra.mxu0 0.0
      %759 = vmatprep.subr.mxu0 0.0
      %760 = vmatpush1.msra.mxu0 0.0
      %761 = vmatprep.subr.mxu0 0.0
      %762 = vmatpush1.msra.mxu0 0.0
      %763 = vmatprep.subr.mxu0 0.0
      %764 = vmatpush1.msra.mxu0 0.0
      %765 = vmatprep.subr.mxu0 0.0
      %766 = vmatpush1.msra.mxu0 0.0
      %767 = vmatprep.subr.mxu0 0.0
      %768 = vmatpush1.msra.mxu0 0.0
      %769 = vmatprep.subr.mxu0 0.0
      %770 = vmatpush1.msra.mxu0 0.0
      %771 = vmatprep.subr.mxu0 0.0
      %772 = vmatpush1.msra.mxu0 0.0
      %773 = vmatprep.subr.mxu0 0.0
      %774 = vmatpush1.msra.mxu0 0.0
      %775 = vmatprep.subr.mxu0 0.0
      %776 = vmatpush1.msra.mxu0 0.0
      %777 = vmatprep.subr.mxu0 0.0
      %778 = vmatpush1.msra.mxu0 %v738
      %779 = vmatprep.subr.mxu0 0.0
      %780 = vmatpush1.msra.mxu0 %v737
      %781 = vmatprep.subr.mxu0 0.0
      %782 = vmatpush1.msra.mxu0 %v736
      %783 = vmatprep.subr.mxu0 0.0
      %784 = vmatpush1.msra.mxu0 %v735
      %785 = vmatprep.subr.mxu0 0.0
      %786 = vmatpush2.msra.mxu0 0.0
      %787 = vmatprep.subr.mxu0 0.0
      %788 = vmatpush2.msra.mxu0 0.0
      %789 = vmatprep.subr.mxu0 0.0
      %790 = vmatpush2.msra.mxu0 0.0
      %791 = vmatprep.subr.mxu0 0.0
      %792 = vmatpush2.msra.mxu0 0.0
      %793 = vmatprep.subr.mxu0 0.0
      %794 = vmatpush2.msra.mxu0 0.0
      %795 = vmatprep.subr.mxu0 0.0
      %796 = vmatpush2.msra.mxu0 0.0
      %797 = vmatprep.subr.mxu0 0.0
      %798 = vmatpush2.msra.mxu0 0.0
      %799 = vmatprep.subr.mxu0 0.0
      %800 = vmatpush2.msra.mxu0 0.0
      %801 = vmatprep.subr.mxu0 0.0
      %802 = vmatpush2.msra.mxu0 0.0
      %803 = vmatprep.subr.mxu0 0.0
      %804 = vmatpush2.msra.mxu0 0.0
      %805 = vmatprep.subr.mxu0 0.0
      %806 = vmatpush2.msra.mxu0 0.0
      %807 = vmatprep.subr.mxu0 0.0
      %808 = vmatpush2.msra.mxu0 0.0
      %809 = vmatprep.subr.mxu0 0.0
      %810 = vmatpush2.msra.mxu0 0.0
      %811 = vmatprep.subr.mxu0 0.0
      %812 = vmatpush2.msra.mxu0 0.0
      %813 = vmatprep.subr.mxu0 0.0
      %814 = vmatpush2.msra.mxu0 0.0
      %815 = vmatprep.subr.mxu0 0.0
      %816 = vmatpush2.msra.mxu0 0.0
      %817 = vmatprep.mubr.f32.mxu0 0.0
      %818 = vmatmul.mubr.f32.gmra.mxu0 %v748
      %v819 = vpop.f32.mrf.mxu0
      %v820 = vadd.f32 %v744, %v819
      %v821 = vpop.f32.mrf.mxu0
      %822 = vmatprep.mubr.f32.mxu0 0.0
      %823 = vmatmul.mubr.f32.gmra.mxu0 %v751
      %v824 = vpop.f32.mrf.mxu0
      %v825 = vadd.f32 %v744, %v824
      %v826 = vpop.f32.mrf.mxu0
      %827 = vdwg.mxu0
      %v828 = vld [vmem:[%s1] sm:$0x3]
      %v831 = vunpack.c.l.s4 1966171168
      %v832 = vunpack.c.0.s8 %v831
      %v833 = vlaneseq
      %v834 = vshrl.u32 %v833, 7
      %v835 = vsub.s32 %v832, %v834
      %v836 = vrot.slane %v828, %v835
      %v837 = vcombine.high %v836, %v836
      %v839 = vunpack.c.l.s4 1966171168
      %v840 = vunpack.c.0.s8 %v839
      %v841 = vlaneseq
      %v842 = vshrl.u32 %v841, 7
      %v843 = vsub.s32 %v840, %v842
      %v844 = vrot.slane %v836, %v843
      %v846 = vunpack.c.l.s4 1966171168
      %v847 = vunpack.c.0.s8 %v846
      %v848 = vlaneseq
      %v849 = vshrl.u32 %v848, 7
      %v850 = vsub.s32 %v847, %v849
      %v851 = vrot.slane %v837, %v850
      %v852 = vld [vmem:[%s647] sm:$0xff]
      %v853 = vld [vmem:[%s647 + $0x8] sm:$0xff]
      %v854 = vld [vmem:[%s647 + $0x10] sm:$0xff]
      %v855 = vld [vmem:[%s647 + $0x18] sm:$0xff]
      %857 = vrot.lane.b32.xlu0 %v820, 96
      %v858 = vpop.permute.xlu0 %857
      %vm859 = vcmask 130048
      %v860 = vsel %vm859, %v820, 0
      %v862 = vsel %vm859, %v858, 0
      %864 = vmatprep.subr.mxu0 0.0
      %865 = vmatpush1.xpose.msra.mxu0 0.0
      %866 = vmatprep.subr.mxu0 0.0
      %867 = vmatpush1.xpose.msra.mxu0 0.0
      %868 = vmatprep.subr.mxu0 0.0
      %869 = vmatpush1.xpose.msra.mxu0 0.0
      %870 = vmatprep.subr.mxu0 0.0
      %871 = vmatpush1.xpose.msra.mxu0 0.0
      %872 = vmatprep.subr.mxu0 0.0
      %873 = vmatpush1.xpose.msra.mxu0 0.0
      %874 = vmatprep.subr.mxu0 0.0
      %875 = vmatpush1.xpose.msra.mxu0 0.0
      %876 = vmatprep.subr.mxu0 0.0
      %877 = vmatpush1.xpose.msra.mxu0 0.0
      %878 = vmatprep.subr.mxu0 0.0
      %879 = vmatpush1.xpose.msra.mxu0 0.0
      %880 = vmatprep.subr.mxu0 0.0
      %881 = vmatpush1.xpose.msra.mxu0 0.0
      %882 = vmatprep.subr.mxu0 0.0
      %883 = vmatpush1.xpose.msra.mxu0 0.0
      %884 = vmatprep.subr.mxu0 0.0
      %885 = vmatpush1.xpose.msra.mxu0 0.0
      %886 = vmatprep.subr.mxu0 0.0
      %887 = vmatpush1.xpose.msra.mxu0 0.0
      %888 = vmatprep.subr.mxu0 0.0
      %889 = vmatpush1.xpose.msra.mxu0 0.0
      %890 = vmatprep.subr.mxu0 0.0
      %891 = vmatpush1.xpose.msra.mxu0 0.0
      %892 = vmatprep.subr.mxu0 0.0
      %893 = vmatpush1.xpose.msra.mxu0 0.0
      %894 = vmatprep.subr.mxu0 0.0
      %895 = vmatpush1.xpose.msra.mxu0 %v862
      %896 = vmatprep.subr.mxu0 0.0
      %897 = vmatpush2.xpose.msra.mxu0 0.0
      %898 = vmatprep.subr.mxu0 0.0
      %899 = vmatpush2.xpose.msra.mxu0 0.0
      %900 = vmatprep.subr.mxu0 0.0
      %901 = vmatpush2.xpose.msra.mxu0 0.0
      %902 = vmatprep.subr.mxu0 0.0
      %903 = vmatpush2.xpose.msra.mxu0 0.0
      %904 = vmatprep.subr.mxu0 0.0
      %905 = vmatpush2.xpose.msra.mxu0 0.0
      %906 = vmatprep.subr.mxu0 0.0
      %907 = vmatpush2.xpose.msra.mxu0 0.0
      %908 = vmatprep.subr.mxu0 0.0
      %909 = vmatpush2.xpose.msra.mxu0 0.0
      %910 = vmatprep.subr.mxu0 0.0
      %911 = vmatpush2.xpose.msra.mxu0 0.0
      %912 = vmatprep.subr.mxu0 0.0
      %913 = vmatpush2.xpose.msra.mxu0 0.0
      %914 = vmatprep.subr.mxu0 0.0
      %915 = vmatpush2.xpose.msra.mxu0 0.0
      %916 = vmatprep.subr.mxu0 0.0
      %917 = vmatpush2.xpose.msra.mxu0 0.0
      %918 = vmatprep.subr.mxu0 0.0
      %919 = vmatpush2.xpose.msra.mxu0 0.0
      %920 = vmatprep.subr.mxu0 0.0
      %921 = vmatpush2.xpose.msra.mxu0 0.0
      %922 = vmatprep.subr.mxu0 0.0
      %923 = vmatpush2.xpose.msra.mxu0 0.0
      %924 = vmatprep.subr.mxu0 0.0
      %925 = vmatpush2.xpose.msra.mxu0 0.0
      %926 = vmatprep.subr.mxu0 0.0
      %927 = vmatpush2.xpose.msra.mxu0 0.0
      %928 = vmatprep.mubr.f32.mxu0 0.0
      %929 = vmatmul.mubr.f32.gmra.mxu0 %v860
      %v930 = vpop.f32.mrf.mxu0
      %v931 = vadd.f32 0.0, %v930
      %v932 = vpop.f32.mrf.mxu0
      %933 = vdwg.mxu0
      %935 = vrot.lane.b32.xlu0 %v825, 96
      %v936 = vpop.permute.xlu0 %935
      %v937 = vsel %vm859, %v825, 0
      %v939 = vsel %vm859, %v936, 0
      %941 = vmatprep.subr.mxu0 0.0
      %942 = vmatpush1.xpose.msra.mxu0 0.0
      %943 = vmatprep.subr.mxu0 0.0
      %944 = vmatpush1.xpose.msra.mxu0 0.0
      %945 = vmatprep.subr.mxu0 0.0
      %946 = vmatpush1.xpose.msra.mxu0 0.0
      %947 = vmatprep.subr.mxu0 0.0
      %948 = vmatpush1.xpose.msra.mxu0 0.0
      %949 = vmatprep.subr.mxu0 0.0
      %950 = vmatpush1.xpose.msra.mxu0 0.0
      %951 = vmatprep.subr.mxu0 0.0
      %952 = vmatpush1.xpose.msra.mxu0 0.0
      %953 = vmatprep.subr.mxu0 0.0
      %954 = vmatpush1.xpose.msra.mxu0 0.0
      %955 = vmatprep.subr.mxu0 0.0
      %956 = vmatpush1.xpose.msra.mxu0 0.0
      %957 = vmatprep.subr.mxu0 0.0
      %958 = vmatpush1.xpose.msra.mxu0 0.0
      %959 = vmatprep.subr.mxu0 0.0
      %960 = vmatpush1.xpose.msra.mxu0 0.0
      %961 = vmatprep.subr.mxu0 0.0
      %962 = vmatpush1.xpose.msra.mxu0 0.0
      %963 = vmatprep.subr.mxu0 0.0
      %964 = vmatpush1.xpose.msra.mxu0 0.0
      %965 = vmatprep.subr.mxu0 0.0
      %966 = vmatpush1.xpose.msra.mxu0 0.0
      %967 = vmatprep.subr.mxu0 0.0
      %968 = vmatpush1.xpose.msra.mxu0 0.0
      %969 = vmatprep.subr.mxu0 0.0
      %970 = vmatpush1.xpose.msra.mxu0 0.0
      %971 = vmatprep.subr.mxu0 0.0
      %972 = vmatpush1.xpose.msra.mxu0 %v939
      %973 = vmatprep.subr.mxu0 0.0
      %974 = vmatpush2.xpose.msra.mxu0 0.0
      %975 = vmatprep.subr.mxu0 0.0
      %976 = vmatpush2.xpose.msra.mxu0 0.0
      %977 = vmatprep.subr.mxu0 0.0
      %978 = vmatpush2.xpose.msra.mxu0 0.0
      %979 = vmatprep.subr.mxu0 0.0
      %980 = vmatpush2.xpose.msra.mxu0 0.0
      %981 = vmatprep.subr.mxu0 0.0
      %982 = vmatpush2.xpose.msra.mxu0 0.0
      %983 = vmatprep.subr.mxu0 0.0
      %984 = vmatpush2.xpose.msra.mxu0 0.0
      %985 = vmatprep.subr.mxu0 0.0
      %986 = vmatpush2.xpose.msra.mxu0 0.0
      %987 = vmatprep.subr.mxu0 0.0
      %988 = vmatpush2.xpose.msra.mxu0 0.0
      %989 = vmatprep.subr.mxu0 0.0
      %990 = vmatpush2.xpose.msra.mxu0 0.0
      %991 = vmatprep.subr.mxu0 0.0
      %992 = vmatpush2.xpose.msra.mxu0 0.0
      %993 = vmatprep.subr.mxu0 0.0
      %994 = vmatpush2.xpose.msra.mxu0 0.0
      %995 = vmatprep.subr.mxu0 0.0
      %996 = vmatpush2.xpose.msra.mxu0 0.0
      %997 = vmatprep.subr.mxu0 0.0
      %998 = vmatpush2.xpose.msra.mxu0 0.0
      %999 = vmatprep.subr.mxu0 0.0
      %1000 = vmatpush2.xpose.msra.mxu0 0.0
      %1001 = vmatprep.subr.mxu0 0.0
      %1002 = vmatpush2.xpose.msra.mxu0 0.0
      %1003 = vmatprep.subr.mxu0 0.0
      %1004 = vmatpush2.xpose.msra.mxu0 0.0
      %1005 = vmatprep.mubr.f32.mxu0 0.0
      %1006 = vmatmul.mubr.f32.gmra.mxu0 %v937
      %v1007 = vpop.f32.mrf.mxu0
      %v1008 = vadd.f32 0.0, %v1007
      %v1009 = vpop.f32.mrf.mxu0
      %1010 = vdwg.mxu0
      %v1011 = vmul.f32 %v931, 0.25
      %v1012 = vmul.f32 %v1008, 0.25
      %v1013 = vlaneseq
      %v1014 = vshrl.u32 %v1013, 7
      %v1015 = vsub.s32 0, %v1014
      %v1016 = vrot.slane %v844, %v1015
      %v1017 = vlaneseq
      %v1018 = vshrl.u32 %v1017, 7
      %v1019 = vsub.s32 0, %v1018
      %v1020 = vrot.slane %v851, %v1019
      %v1023 = vadd.f32 %v1011, %v1016
      %v1024 = vadd.f32 %v1012, %v1020
      %vm1025 = vcmask 64512
      %v1026 = vsel %vm1025, %v1023, -inf
      %1027 = vmax.xlane.f32.xlu0 %v1026
      %v1028 = vpop.xlane.xlu0 %1027
      %v1029 = vsel %vm1025, %v1024, -inf
      %1030 = vmax.xlane.f32.xlu0 %v1029
      %v1031 = vpop.xlane.xlu0 %1030
      %v1032 = vsub.f32 %v1023, %v1028
      %v1033 = vsub.f32 %v1024, %v1031
      %v1034 = vmul.f32 %v1032, 1.442695
      %v1035 = vpow.pop %v1034
      %v1036 = vmul.f32 %v1033, 1.442695
      %v1037 = vpow.pop %v1036
      %v1038 = vsel %vm1025, %v1035, 0.0
      %1039 = vadd.xlane.f32.xlu0 %v1038
      %v1040 = vpop.xlane.xlu0 %1039
      %v1041 = vsel %vm1025, %v1037, 0.0
      %1042 = vadd.xlane.f32.xlu0 %v1041
      %v1043 = vpop.xlane.xlu0 %1042
      %v1044 = vrcp.pop %v1040
      %v1045 = vrcp.pop %v1043
      %v1046 = vmul.f32 %v1035, %v1044
      %v1047 = vmul.f32 %v1037, %v1045
      %1048 = vrot.lane.b32.xlu0 %v820, 64
      %v1049 = vpop.permute.xlu0 %1048
      %v1052 = vsel %vm1025, %v1046, 0
      %1054 = vmatprep.subr.mxu0 0.0
      %1055 = vmatpush1.msra.mxu0 0.0
      %1056 = vmatprep.subr.mxu0 0.0
      %1057 = vmatpush1.msra.mxu0 0.0
      %1058 = vmatprep.subr.mxu0 0.0
      %1059 = vmatpush1.msra.mxu0 0.0
      %1060 = vmatprep.subr.mxu0 0.0
      %1061 = vmatpush1.msra.mxu0 0.0
      %1062 = vmatprep.subr.mxu0 0.0
      %1063 = vmatpush1.msra.mxu0 0.0
      %1064 = vmatprep.subr.mxu0 0.0
      %1065 = vmatpush1.msra.mxu0 0.0
      %1066 = vmatprep.subr.mxu0 0.0
      %1067 = vmatpush1.msra.mxu0 0.0
      %1068 = vmatprep.subr.mxu0 0.0
      %1069 = vmatpush1.msra.mxu0 0.0
      %1070 = vmatprep.subr.mxu0 0.0
      %1071 = vmatpush1.msra.mxu0 0.0
      %1072 = vmatprep.subr.mxu0 0.0
      %1073 = vmatpush1.msra.mxu0 0.0
      %1074 = vmatprep.subr.mxu0 0.0
      %1075 = vmatpush1.msra.mxu0 0.0
      %1076 = vmatprep.subr.mxu0 0.0
      %1077 = vmatpush1.msra.mxu0 0.0
      %1078 = vmatprep.subr.mxu0 0.0
      %1079 = vmatpush1.msra.mxu0 0.0
      %1080 = vmatprep.subr.mxu0 0.0
      %1081 = vmatpush1.msra.mxu0 0.0
      %1082 = vmatprep.subr.mxu0 0.0
      %1083 = vmatpush1.msra.mxu0 0.0
      %1084 = vmatprep.subr.mxu0 0.0
      %1085 = vmatpush1.msra.mxu0 %v1049
      %1086 = vmatprep.subr.mxu0 0.0
      %1087 = vmatpush2.msra.mxu0 0.0
      %1088 = vmatprep.subr.mxu0 0.0
      %1089 = vmatpush2.msra.mxu0 0.0
      %1090 = vmatprep.subr.mxu0 0.0
      %1091 = vmatpush2.msra.mxu0 0.0
      %1092 = vmatprep.subr.mxu0 0.0
      %1093 = vmatpush2.msra.mxu0 0.0
      %1094 = vmatprep.subr.mxu0 0.0
      %1095 = vmatpush2.msra.mxu0 0.0
      %1096 = vmatprep.subr.mxu0 0.0
      %1097 = vmatpush2.msra.mxu0 0.0
      %1098 = vmatprep.subr.mxu0 0.0
      %1099 = vmatpush2.msra.mxu0 0.0
      %1100 = vmatprep.subr.mxu0 0.0
      %1101 = vmatpush2.msra.mxu0 0.0
      %1102 = vmatprep.subr.mxu0 0.0
      %1103 = vmatpush2.msra.mxu0 0.0
      %1104 = vmatprep.subr.mxu0 0.0
      %1105 = vmatpush2.msra.mxu0 0.0
      %1106 = vmatprep.subr.mxu0 0.0
      %1107 = vmatpush2.msra.mxu0 0.0
      %1108 = vmatprep.subr.mxu0 0.0
      %1109 = vmatpush2.msra.mxu0 0.0
      %1110 = vmatprep.subr.mxu0 0.0
      %1111 = vmatpush2.msra.mxu0 0.0
      %1112 = vmatprep.subr.mxu0 0.0
      %1113 = vmatpush2.msra.mxu0 0.0
      %1114 = vmatprep.subr.mxu0 0.0
      %1115 = vmatpush2.msra.mxu0 0.0
      %1116 = vmatprep.subr.mxu0 0.0
      %1117 = vmatpush2.msra.mxu0 0.0
      %1118 = vmatprep.mubr.f32.mxu0 0.0
      %1119 = vmatmul.mubr.f32.gmra.mxu0 %v1052
      %v1120 = vpop.f32.mrf.mxu0
      %v1121 = vadd.f32 0.0, %v1120
      %v1122 = vpop.f32.mrf.mxu0
      %1123 = vdwg.mxu0
      %1124 = vrot.lane.b32.xlu0 %v825, 64
      %v1125 = vpop.permute.xlu0 %1124
      %v1128 = vsel %vm1025, %v1047, 0
      %1130 = vmatprep.subr.mxu0 0.0
      %1131 = vmatpush1.msra.mxu0 0.0
      %1132 = vmatprep.subr.mxu0 0.0
      %1133 = vmatpush1.msra.mxu0 0.0
      %1134 = vmatprep.subr.mxu0 0.0
      %1135 = vmatpush1.msra.mxu0 0.0
      %1136 = vmatprep.subr.mxu0 0.0
      %1137 = vmatpush1.msra.mxu0 0.0
      %1138 = vmatprep.subr.mxu0 0.0
      %1139 = vmatpush1.msra.mxu0 0.0
      %1140 = vmatprep.subr.mxu0 0.0
      %1141 = vmatpush1.msra.mxu0 0.0
      %1142 = vmatprep.subr.mxu0 0.0
      %1143 = vmatpush1.msra.mxu0 0.0
      %1144 = vmatprep.subr.mxu0 0.0
      %1145 = vmatpush1.msra.mxu0 0.0
      %1146 = vmatprep.subr.mxu0 0.0
      %1147 = vmatpush1.msra.mxu0 0.0
      %1148 = vmatprep.subr.mxu0 0.0
      %1149 = vmatpush1.msra.mxu0 0.0
      %1150 = vmatprep.subr.mxu0 0.0
      %1151 = vmatpush1.msra.mxu0 0.0
      %1152 = vmatprep.subr.mxu0 0.0
      %1153 = vmatpush1.msra.mxu0 0.0
      %1154 = vmatprep.subr.mxu0 0.0
      %1155 = vmatpush1.msra.mxu0 0.0
      %1156 = vmatprep.subr.mxu0 0.0
      %1157 = vmatpush1.msra.mxu0 0.0
      %1158 = vmatprep.subr.mxu0 0.0
      %1159 = vmatpush1.msra.mxu0 0.0
      %1160 = vmatprep.subr.mxu0 0.0
      %1161 = vmatpush1.msra.mxu0 %v1125
      %1162 = vmatprep.subr.mxu0 0.0
      %1163 = vmatpush2.msra.mxu0 0.0
      %1164 = vmatprep.subr.mxu0 0.0
      %1165 = vmatpush2.msra.mxu0 0.0
      %1166 = vmatprep.subr.mxu0 0.0
      %1167 = vmatpush2.msra.mxu0 0.0
      %1168 = vmatprep.subr.mxu0 0.0
      %1169 = vmatpush2.msra.mxu0 0.0
      %1170 = vmatprep.subr.mxu0 0.0
      %1171 = vmatpush2.msra.mxu0 0.0
      %1172 = vmatprep.subr.mxu0 0.0
      %1173 = vmatpush2.msra.mxu0 0.0
      %1174 = vmatprep.subr.mxu0 0.0
      %1175 = vmatpush2.msra.mxu0 0.0
      %1176 = vmatprep.subr.mxu0 0.0
      %1177 = vmatpush2.msra.mxu0 0.0
      %1178 = vmatprep.subr.mxu0 0.0
      %1179 = vmatpush2.msra.mxu0 0.0
      %1180 = vmatprep.subr.mxu0 0.0
      %1181 = vmatpush2.msra.mxu0 0.0
      %1182 = vmatprep.subr.mxu0 0.0
      %1183 = vmatpush2.msra.mxu0 0.0
      %1184 = vmatprep.subr.mxu0 0.0
      %1185 = vmatpush2.msra.mxu0 0.0
      %1186 = vmatprep.subr.mxu0 0.0
      %1187 = vmatpush2.msra.mxu0 0.0
      %1188 = vmatprep.subr.mxu0 0.0
      %1189 = vmatpush2.msra.mxu0 0.0
      %1190 = vmatprep.subr.mxu0 0.0
      %1191 = vmatpush2.msra.mxu0 0.0
      %1192 = vmatprep.subr.mxu0 0.0
      %1193 = vmatpush2.msra.mxu0 0.0
      %1194 = vmatprep.mubr.f32.mxu0 0.0
      %1195 = vmatmul.mubr.f32.gmra.mxu0 %v1128
      %v1196 = vpop.f32.mrf.mxu0
      %v1197 = vadd.f32 0.0, %v1196
      %v1198 = vpop.f32.mrf.mxu0
      %1199 = vdwg.mxu0
      %1200 = vrot.lane.b32.xlu0 %v820, 112
      %v1201 = vpop.permute.xlu0 %1200
      %1202 = vrot.lane.b32.xlu0 %v820, 80
      %v1203 = vpop.permute.xlu0 %1202
      %v1204 = vsel %vm859, %v1201, 0
      %v1206 = vsel %vm859, %v1203, 0
      %1208 = vmatprep.subr.mxu0 0.0
      %1209 = vmatpush1.xpose.msra.mxu0 0.0
      %1210 = vmatprep.subr.mxu0 0.0
      %1211 = vmatpush1.xpose.msra.mxu0 0.0
      %1212 = vmatprep.subr.mxu0 0.0
      %1213 = vmatpush1.xpose.msra.mxu0 0.0
      %1214 = vmatprep.subr.mxu0 0.0
      %1215 = vmatpush1.xpose.msra.mxu0 0.0
      %1216 = vmatprep.subr.mxu0 0.0
      %1217 = vmatpush1.xpose.msra.mxu0 0.0
      %1218 = vmatprep.subr.mxu0 0.0
      %1219 = vmatpush1.xpose.msra.mxu0 0.0
      %1220 = vmatprep.subr.mxu0 0.0
      %1221 = vmatpush1.xpose.msra.mxu0 0.0
      %1222 = vmatprep.subr.mxu0 0.0
      %1223 = vmatpush1.xpose.msra.mxu0 0.0
      %1224 = vmatprep.subr.mxu0 0.0
      %1225 = vmatpush1.xpose.msra.mxu0 0.0
      %1226 = vmatprep.subr.mxu0 0.0
      %1227 = vmatpush1.xpose.msra.mxu0 0.0
      %1228 = vmatprep.subr.mxu0 0.0
      %1229 = vmatpush1.xpose.msra.mxu0 0.0
      %1230 = vmatprep.subr.mxu0 0.0
      %1231 = vmatpush1.xpose.msra.mxu0 0.0
      %1232 = vmatprep.subr.mxu0 0.0
      %1233 = vmatpush1.xpose.msra.mxu0 0.0
      %1234 = vmatprep.subr.mxu0 0.0
      %1235 = vmatpush1.xpose.msra.mxu0 0.0
      %1236 = vmatprep.subr.mxu0 0.0
      %1237 = vmatpush1.xpose.msra.mxu0 0.0
      %1238 = vmatprep.subr.mxu0 0.0
      %1239 = vmatpush1.xpose.msra.mxu0 %v1206
      %1240 = vmatprep.subr.mxu0 0.0
      %1241 = vmatpush2.xpose.msra.mxu0 0.0
      %1242 = vmatprep.subr.mxu0 0.0
      %1243 = vmatpush2.xpose.msra.mxu0 0.0
      %1244 = vmatprep.subr.mxu0 0.0
      %1245 = vmatpush2.xpose.msra.mxu0 0.0
      %1246 = vmatprep.subr.mxu0 0.0
      %1247 = vmatpush2.xpose.msra.mxu0 0.0
      %1248 = vmatprep.subr.mxu0 0.0
      %1249 = vmatpush2.xpose.msra.mxu0 0.0
      %1250 = vmatprep.subr.mxu0 0.0
      %1251 = vmatpush2.xpose.msra.mxu0 0.0
      %1252 = vmatprep.subr.mxu0 0.0
      %1253 = vmatpush2.xpose.msra.mxu0 0.0
      %1254 = vmatprep.subr.mxu0 0.0
      %1255 = vmatpush2.xpose.msra.mxu0 0.0
      %1256 = vmatprep.subr.mxu0 0.0
      %1257 = vmatpush2.xpose.msra.mxu0 0.0
      %1258 = vmatprep.subr.mxu0 0.0
      %1259 = vmatpush2.xpose.msra.mxu0 0.0
      %1260 = vmatprep.subr.mxu0 0.0
      %1261 = vmatpush2.xpose.msra.mxu0 0.0
      %1262 = vmatprep.subr.mxu0 0.0
      %1263 = vmatpush2.xpose.msra.mxu0 0.0
      %1264 = vmatprep.subr.mxu0 0.0
      %1265 = vmatpush2.xpose.msra.mxu0 0.0
      %1266 = vmatprep.subr.mxu0 0.0
      %1267 = vmatpush2.xpose.msra.mxu0 0.0
      %1268 = vmatprep.subr.mxu0 0.0
      %1269 = vmatpush2.xpose.msra.mxu0 0.0
      %1270 = vmatprep.subr.mxu0 0.0
      %1271 = vmatpush2.xpose.msra.mxu0 0.0
      %1272 = vmatprep.mubr.f32.mxu0 0.0
      %1273 = vmatmul.mubr.f32.gmra.mxu0 %v1204
      %v1274 = vpop.f32.mrf.mxu0
      %v1275 = vadd.f32 0.0, %v1274
      %v1276 = vpop.f32.mrf.mxu0
      %1277 = vdwg.mxu0
      %1278 = vrot.lane.b32.xlu0 %v825, 112
      %v1279 = vpop.permute.xlu0 %1278
      %1280 = vrot.lane.b32.xlu0 %v825, 80
      %v1281 = vpop.permute.xlu0 %1280
      %v1282 = vsel %vm859, %v1279, 0
      %v1284 = vsel %vm859, %v1281, 0
      %1286 = vmatprep.subr.mxu0 0.0
      %1287 = vmatpush1.xpose.msra.mxu0 0.0
      %1288 = vmatprep.subr.mxu0 0.0
      %1289 = vmatpush1.xpose.msra.mxu0 0.0
      %1290 = vmatprep.subr.mxu0 0.0
      %1291 = vmatpush1.xpose.msra.mxu0 0.0
      %1292 = vmatprep.subr.mxu0 0.0
      %1293 = vmatpush1.xpose.msra.mxu0 0.0
      %1294 = vmatprep.subr.mxu0 0.0
      %1295 = vmatpush1.xpose.msra.mxu0 0.0
      %1296 = vmatprep.subr.mxu0 0.0
      %1297 = vmatpush1.xpose.msra.mxu0 0.0
      %1298 = vmatprep.subr.mxu0 0.0
      %1299 = vmatpush1.xpose.msra.mxu0 0.0
      %1300 = vmatprep.subr.mxu0 0.0
      %1301 = vmatpush1.xpose.msra.mxu0 0.0
      %1302 = vmatprep.subr.mxu0 0.0
      %1303 = vmatpush1.xpose.msra.mxu0 0.0
      %1304 = vmatprep.subr.mxu0 0.0
      %1305 = vmatpush1.xpose.msra.mxu0 0.0
      %1306 = vmatprep.subr.mxu0 0.0
      %1307 = vmatpush1.xpose.msra.mxu0 0.0
      %1308 = vmatprep.subr.mxu0 0.0
      %1309 = vmatpush1.xpose.msra.mxu0 0.0
      %1310 = vmatprep.subr.mxu0 0.0
      %1311 = vmatpush1.xpose.msra.mxu0 0.0
      %1312 = vmatprep.subr.mxu0 0.0
      %1313 = vmatpush1.xpose.msra.mxu0 0.0
      %1314 = vmatprep.subr.mxu0 0.0
      %1315 = vmatpush1.xpose.msra.mxu0 0.0
      %1316 = vmatprep.subr.mxu0 0.0
      %1317 = vmatpush1.xpose.msra.mxu0 %v1284
      %1318 = vmatprep.subr.mxu0 0.0
      %1319 = vmatpush2.xpose.msra.mxu0 0.0
      %1320 = vmatprep.subr.mxu0 0.0
      %1321 = vmatpush2.xpose.msra.mxu0 0.0
      %1322 = vmatprep.subr.mxu0 0.0
      %1323 = vmatpush2.xpose.msra.mxu0 0.0
      %1324 = vmatprep.subr.mxu0 0.0
      %1325 = vmatpush2.xpose.msra.mxu0 0.0
      %1326 = vmatprep.subr.mxu0 0.0
      %1327 = vmatpush2.xpose.msra.mxu0 0.0
      %1328 = vmatprep.subr.mxu0 0.0
      %1329 = vmatpush2.xpose.msra.mxu0 0.0
      %1330 = vmatprep.subr.mxu0 0.0
      %1331 = vmatpush2.xpose.msra.mxu0 0.0
      %1332 = vmatprep.subr.mxu0 0.0
      %1333 = vmatpush2.xpose.msra.mxu0 0.0
      %1334 = vmatprep.subr.mxu0 0.0
      %1335 = vmatpush2.xpose.msra.mxu0 0.0
      %1336 = vmatprep.subr.mxu0 0.0
      %1337 = vmatpush2.xpose.msra.mxu0 0.0
      %1338 = vmatprep.subr.mxu0 0.0
      %1339 = vmatpush2.xpose.msra.mxu0 0.0
      %1340 = vmatprep.subr.mxu0 0.0
      %1341 = vmatpush2.xpose.msra.mxu0 0.0
      %1342 = vmatprep.subr.mxu0 0.0
      %1343 = vmatpush2.xpose.msra.mxu0 0.0
      %1344 = vmatprep.subr.mxu0 0.0
      %1345 = vmatpush2.xpose.msra.mxu0 0.0
      %1346 = vmatprep.subr.mxu0 0.0
      %1347 = vmatpush2.xpose.msra.mxu0 0.0
      %1348 = vmatprep.subr.mxu0 0.0
      %1349 = vmatpush2.xpose.msra.mxu0 0.0
      %1350 = vmatprep.mubr.f32.mxu0 0.0
      %1351 = vmatmul.mubr.f32.gmra.mxu0 %v1282
      %v1352 = vpop.f32.mrf.mxu0
      %v1353 = vadd.f32 0.0, %v1352
      %v1354 = vpop.f32.mrf.mxu0
      %1355 = vdwg.mxu0
      %v1356 = vmul.f32 %v1275, 0.25
      %v1357 = vmul.f32 %v1353, 0.25
      %v1358 = vadd.f32 %v1356, %v1016
      %v1359 = vadd.f32 %v1357, %v1020
      %v1360 = vsel %vm1025, %v1358, -inf
      %1361 = vmax.xlane.f32.xlu0 %v1360
      %v1362 = vpop.xlane.xlu0 %1361
      %v1363 = vsel %vm1025, %v1359, -inf
      %1364 = vmax.xlane.f32.xlu0 %v1363
      %v1365 = vpop.xlane.xlu0 %1364
      %v1366 = vsub.f32 %v1358, %v1362
      %v1367 = vsub.f32 %v1359, %v1365
      %v1368 = vmul.f32 %v1366, 1.442695
      %v1369 = vpow.pop %v1368
      %v1370 = vmul.f32 %v1367, 1.442695
      %v1371 = vpow.pop %v1370
      %v1372 = vsel %vm1025, %v1369, 0.0
      %1373 = vadd.xlane.f32.xlu0 %v1372
      %v1374 = vpop.xlane.xlu0 %1373
      %v1375 = vsel %vm1025, %v1371, 0.0
      %1376 = vadd.xlane.f32.xlu0 %v1375
      %v1377 = vpop.xlane.xlu0 %1376
      %v1378 = vrcp.pop %v1374
      %v1379 = vrcp.pop %v1377
      %v1380 = vmul.f32 %v1369, %v1378
      %v1381 = vmul.f32 %v1371, %v1379
      %1382 = vrot.lane.b32.xlu0 %v820, 48
      %v1383 = vpop.permute.xlu0 %1382
      %v1386 = vsel %vm1025, %v1380, 0
      %1388 = vmatprep.subr.mxu0 0.0
      %1389 = vmatpush1.msra.mxu0 0.0
      %1390 = vmatprep.subr.mxu0 0.0
      %1391 = vmatpush1.msra.mxu0 0.0
      %1392 = vmatprep.subr.mxu0 0.0
      %1393 = vmatpush1.msra.mxu0 0.0
      %1394 = vmatprep.subr.mxu0 0.0
      %1395 = vmatpush1.msra.mxu0 0.0
      %1396 = vmatprep.subr.mxu0 0.0
      %1397 = vmatpush1.msra.mxu0 0.0
      %1398 = vmatprep.subr.mxu0 0.0
      %1399 = vmatpush1.msra.mxu0 0.0
      %1400 = vmatprep.subr.mxu0 0.0
      %1401 = vmatpush1.msra.mxu0 0.0
      %1402 = vmatprep.subr.mxu0 0.0
      %1403 = vmatpush1.msra.mxu0 0.0
      %1404 = vmatprep.subr.mxu0 0.0
      %1405 = vmatpush1.msra.mxu0 0.0
      %1406 = vmatprep.subr.mxu0 0.0
      %1407 = vmatpush1.msra.mxu0 0.0
      %1408 = vmatprep.subr.mxu0 0.0
      %1409 = vmatpush1.msra.mxu0 0.0
      %1410 = vmatprep.subr.mxu0 0.0
      %1411 = vmatpush1.msra.mxu0 0.0
      %1412 = vmatprep.subr.mxu0 0.0
      %1413 = vmatpush1.msra.mxu0 0.0
      %1414 = vmatprep.subr.mxu0 0.0
      %1415 = vmatpush1.msra.mxu0 0.0
      %1416 = vmatprep.subr.mxu0 0.0
      %1417 = vmatpush1.msra.mxu0 0.0
      %1418 = vmatprep.subr.mxu0 0.0
      %1419 = vmatpush1.msra.mxu0 %v1383
      %1420 = vmatprep.subr.mxu0 0.0
      %1421 = vmatpush2.msra.mxu0 0.0
      %1422 = vmatprep.subr.mxu0 0.0
      %1423 = vmatpush2.msra.mxu0 0.0
      %1424 = vmatprep.subr.mxu0 0.0
      %1425 = vmatpush2.msra.mxu0 0.0
      %1426 = vmatprep.subr.mxu0 0.0
      %1427 = vmatpush2.msra.mxu0 0.0
      %1428 = vmatprep.subr.mxu0 0.0
      %1429 = vmatpush2.msra.mxu0 0.0
      %1430 = vmatprep.subr.mxu0 0.0
      %1431 = vmatpush2.msra.mxu0 0.0
      %1432 = vmatprep.subr.mxu0 0.0
      %1433 = vmatpush2.msra.mxu0 0.0
      %1434 = vmatprep.subr.mxu0 0.0
      %1435 = vmatpush2.msra.mxu0 0.0
      %1436 = vmatprep.subr.mxu0 0.0
      %1437 = vmatpush2.msra.mxu0 0.0
      %1438 = vmatprep.subr.mxu0 0.0
      %1439 = vmatpush2.msra.mxu0 0.0
      %1440 = vmatprep.subr.mxu0 0.0
      %1441 = vmatpush2.msra.mxu0 0.0
      %1442 = vmatprep.subr.mxu0 0.0
      %1443 = vmatpush2.msra.mxu0 0.0
      %1444 = vmatprep.subr.mxu0 0.0
      %1445 = vmatpush2.msra.mxu0 0.0
      %1446 = vmatprep.subr.mxu0 0.0
      %1447 = vmatpush2.msra.mxu0 0.0
      %1448 = vmatprep.subr.mxu0 0.0
      %1449 = vmatpush2.msra.mxu0 0.0
      %1450 = vmatprep.subr.mxu0 0.0
      %1451 = vmatpush2.msra.mxu0 0.0
      %1452 = vmatprep.mubr.f32.mxu0 0.0
      %1453 = vmatmul.mubr.f32.gmra.mxu0 %v1386
      %v1454 = vpop.f32.mrf.mxu0
      %v1455 = vadd.f32 0.0, %v1454
      %v1456 = vpop.f32.mrf.mxu0
      %1457 = vdwg.mxu0
      %1458 = vrot.lane.b32.xlu0 %v825, 48
      %v1459 = vpop.permute.xlu0 %1458
      %v1462 = vsel %vm1025, %v1381, 0
      %1464 = vmatprep.subr.mxu0 0.0
      %1465 = vmatpush1.msra.mxu0 0.0
      %1466 = vmatprep.subr.mxu0 0.0
      %1467 = vmatpush1.msra.mxu0 0.0
      %1468 = vmatprep.subr.mxu0 0.0
      %1469 = vmatpush1.msra.mxu0 0.0
      %1470 = vmatprep.subr.mxu0 0.0
      %1471 = vmatpush1.msra.mxu0 0.0
      %1472 = vmatprep.subr.mxu0 0.0
      %1473 = vmatpush1.msra.mxu0 0.0
      %1474 = vmatprep.subr.mxu0 0.0
      %1475 = vmatpush1.msra.mxu0 0.0
      %1476 = vmatprep.subr.mxu0 0.0
      %1477 = vmatpush1.msra.mxu0 0.0
      %1478 = vmatprep.subr.mxu0 0.0
      %1479 = vmatpush1.msra.mxu0 0.0
      %1480 = vmatprep.subr.mxu0 0.0
      %1481 = vmatpush1.msra.mxu0 0.0
      %1482 = vmatprep.subr.mxu0 0.0
      %1483 = vmatpush1.msra.mxu0 0.0
      %1484 = vmatprep.subr.mxu0 0.0
      %1485 = vmatpush1.msra.mxu0 0.0
      %1486 = vmatprep.subr.mxu0 0.0
      %1487 = vmatpush1.msra.mxu0 0.0
      %1488 = vmatprep.subr.mxu0 0.0
      %1489 = vmatpush1.msra.mxu0 0.0
      %1490 = vmatprep.subr.mxu0 0.0
      %1491 = vmatpush1.msra.mxu0 0.0
      %1492 = vmatprep.subr.mxu0 0.0
      %1493 = vmatpush1.msra.mxu0 0.0
      %1494 = vmatprep.subr.mxu0 0.0
      %1495 = vmatpush1.msra.mxu0 %v1459
      %1496 = vmatprep.subr.mxu0 0.0
      %1497 = vmatpush2.msra.mxu0 0.0
      %1498 = vmatprep.subr.mxu0 0.0
      %1499 = vmatpush2.msra.mxu0 0.0
      %1500 = vmatprep.subr.mxu0 0.0
      %1501 = vmatpush2.msra.mxu0 0.0
      %1502 = vmatprep.subr.mxu0 0.0
      %1503 = vmatpush2.msra.mxu0 0.0
      %1504 = vmatprep.subr.mxu0 0.0
      %1505 = vmatpush2.msra.mxu0 0.0
      %1506 = vmatprep.subr.mxu0 0.0
      %1507 = vmatpush2.msra.mxu0 0.0
      %1508 = vmatprep.subr.mxu0 0.0
      %1509 = vmatpush2.msra.mxu0 0.0
      %1510 = vmatprep.subr.mxu0 0.0
      %1511 = vmatpush2.msra.mxu0 0.0
      %1512 = vmatprep.subr.mxu0 0.0
      %1513 = vmatpush2.msra.mxu0 0.0
      %1514 = vmatprep.subr.mxu0 0.0
      %1515 = vmatpush2.msra.mxu0 0.0
      %1516 = vmatprep.subr.mxu0 0.0
      %1517 = vmatpush2.msra.mxu0 0.0
      %1518 = vmatprep.subr.mxu0 0.0
      %1519 = vmatpush2.msra.mxu0 0.0
      %1520 = vmatprep.subr.mxu0 0.0
      %1521 = vmatpush2.msra.mxu0 0.0
      %1522 = vmatprep.subr.mxu0 0.0
      %1523 = vmatpush2.msra.mxu0 0.0
      %1524 = vmatprep.subr.mxu0 0.0
      %1525 = vmatpush2.msra.mxu0 0.0
      %1526 = vmatprep.subr.mxu0 0.0
      %1527 = vmatpush2.msra.mxu0 0.0
      %1528 = vmatprep.mubr.f32.mxu0 0.0
      %1529 = vmatmul.mubr.f32.gmra.mxu0 %v1462
      %v1530 = vpop.f32.mrf.mxu0
      %v1531 = vadd.f32 0.0, %v1530
      %v1532 = vpop.f32.mrf.mxu0
      %1533 = vdwg.mxu0
      %v1535 = vsel %vm859, %v1455, 0
      %v1538 = vsel %vm859, %v1531, 0
      %1540 = vmatprep.subr.mxu0 0.0
      %1541 = vmatpush1.msra.mxu0 0.0
      %1542 = vmatprep.subr.mxu0 0.0
      %1543 = vmatpush1.msra.mxu0 0.0
      %1544 = vmatprep.subr.mxu0 0.0
      %1545 = vmatpush1.msra.mxu0 0.0
      %1546 = vmatprep.subr.mxu0 0.0
      %1547 = vmatpush1.msra.mxu0 0.0
      %1548 = vmatprep.subr.mxu0 0.0
      %1549 = vmatpush1.msra.mxu0 0.0
      %1550 = vmatprep.subr.mxu0 0.0
      %1551 = vmatpush1.msra.mxu0 0.0
      %1552 = vmatprep.subr.mxu0 0.0
      %1553 = vmatpush1.msra.mxu0 0.0
      %1554 = vmatprep.subr.mxu0 0.0
      %1555 = vmatpush1.msra.mxu0 0.0
      %1556 = vmatprep.subr.mxu0 0.0
      %1557 = vmatpush1.msra.mxu0 0.0
      %1558 = vmatprep.subr.mxu0 0.0
      %1559 = vmatpush1.msra.mxu0 0.0
      %1560 = vmatprep.subr.mxu0 0.0
      %1561 = vmatpush1.msra.mxu0 0.0
      %1562 = vmatprep.subr.mxu0 0.0
      %1563 = vmatpush1.msra.mxu0 0.0
      %1564 = vmatprep.subr.mxu0 0.0
      %1565 = vmatpush1.msra.mxu0 0.0
      %1566 = vmatprep.subr.mxu0 0.0
      %1567 = vmatpush1.msra.mxu0 0.0
      %1568 = vmatprep.subr.mxu0 0.0
      %1569 = vmatpush1.msra.mxu0 %v855
      %1570 = vmatprep.subr.mxu0 0.0
      %1571 = vmatpush1.msra.mxu0 %v854
      %1572 = vmatprep.subr.mxu0 0.0
      %1573 = vmatpush2.msra.mxu0 0.0
      %1574 = vmatprep.subr.mxu0 0.0
      %1575 = vmatpush2.msra.mxu0 0.0
      %1576 = vmatprep.subr.mxu0 0.0
      %1577 = vmatpush2.msra.mxu0 0.0
      %1578 = vmatprep.subr.mxu0 0.0
      %1579 = vmatpush2.msra.mxu0 0.0
      %1580 = vmatprep.subr.mxu0 0.0
      %1581 = vmatpush2.msra.mxu0 0.0
      %1582 = vmatprep.subr.mxu0 0.0
      %1583 = vmatpush2.msra.mxu0 0.0
      %1584 = vmatprep.subr.mxu0 0.0
      %1585 = vmatpush2.msra.mxu0 0.0
      %1586 = vmatprep.subr.mxu0 0.0
      %1587 = vmatpush2.msra.mxu0 0.0
      %1588 = vmatprep.subr.mxu0 0.0
      %1589 = vmatpush2.msra.mxu0 0.0
      %1590 = vmatprep.subr.mxu0 0.0
      %1591 = vmatpush2.msra.mxu0 0.0
      %1592 = vmatprep.subr.mxu0 0.0
      %1593 = vmatpush2.msra.mxu0 0.0
      %1594 = vmatprep.subr.mxu0 0.0
      %1595 = vmatpush2.msra.mxu0 0.0
      %1596 = vmatprep.subr.mxu0 0.0
      %1597 = vmatpush2.msra.mxu0 0.0
      %1598 = vmatprep.subr.mxu0 0.0
      %1599 = vmatpush2.msra.mxu0 0.0
      %1600 = vmatprep.subr.mxu0 0.0
      %1601 = vmatpush2.msra.mxu0 0.0
      %1602 = vmatprep.subr.mxu0 0.0
      %1603 = vmatpush2.msra.mxu0 0.0
      %1604 = vmatprep.mubr.f32.mxu0 0.0
      %1605 = vmatmul.mubr.f32.gmra.mxu0 %v1535
      %v1606 = vpop.f32.mrf.mxu0
      %v1607 = vadd.f32 0.0, %v1606
      %v1608 = vpop.f32.mrf.mxu0
      %1609 = vmatprep.mubr.f32.mxu0 0.0
      %1610 = vmatmul.mubr.f32.gmra.mxu0 %v1538
      %v1611 = vpop.f32.mrf.mxu0
      %v1612 = vadd.f32 0.0, %v1611
      %v1613 = vpop.f32.mrf.mxu0
      %1614 = vdwg.mxu0
      %v1616 = vsel %vm859, %v1121, 0
      %v1619 = vsel %vm859, %v1197, 0
      %1621 = vmatprep.subr.mxu0 0.0
      %1622 = vmatpush1.msra.mxu0 0.0
      %1623 = vmatprep.subr.mxu0 0.0
      %1624 = vmatpush1.msra.mxu0 0.0
      %1625 = vmatprep.subr.mxu0 0.0
      %1626 = vmatpush1.msra.mxu0 0.0
      %1627 = vmatprep.subr.mxu0 0.0
      %1628 = vmatpush1.msra.mxu0 0.0
      %1629 = vmatprep.subr.mxu0 0.0
      %1630 = vmatpush1.msra.mxu0 0.0
      %1631 = vmatprep.subr.mxu0 0.0
      %1632 = vmatpush1.msra.mxu0 0.0
      %1633 = vmatprep.subr.mxu0 0.0
      %1634 = vmatpush1.msra.mxu0 0.0
      %1635 = vmatprep.subr.mxu0 0.0
      %1636 = vmatpush1.msra.mxu0 0.0
      %1637 = vmatprep.subr.mxu0 0.0
      %1638 = vmatpush1.msra.mxu0 0.0
      %1639 = vmatprep.subr.mxu0 0.0
      %1640 = vmatpush1.msra.mxu0 0.0
      %1641 = vmatprep.subr.mxu0 0.0
      %1642 = vmatpush1.msra.mxu0 0.0
      %1643 = vmatprep.subr.mxu0 0.0
      %1644 = vmatpush1.msra.mxu0 0.0
      %1645 = vmatprep.subr.mxu0 0.0
      %1646 = vmatpush1.msra.mxu0 0.0
      %1647 = vmatprep.subr.mxu0 0.0
      %1648 = vmatpush1.msra.mxu0 0.0
      %1649 = vmatprep.subr.mxu0 0.0
      %1650 = vmatpush1.msra.mxu0 %v853
      %1651 = vmatprep.subr.mxu0 0.0
      %1652 = vmatpush1.msra.mxu0 %v852
      %1653 = vmatprep.subr.mxu0 0.0
      %1654 = vmatpush2.msra.mxu0 0.0
      %1655 = vmatprep.subr.mxu0 0.0
      %1656 = vmatpush2.msra.mxu0 0.0
      %1657 = vmatprep.subr.mxu0 0.0
      %1658 = vmatpush2.msra.mxu0 0.0
      %1659 = vmatprep.subr.mxu0 0.0
      %1660 = vmatpush2.msra.mxu0 0.0
      %1661 = vmatprep.subr.mxu0 0.0
      %1662 = vmatpush2.msra.mxu0 0.0
      %1663 = vmatprep.subr.mxu0 0.0
      %1664 = vmatpush2.msra.mxu0 0.0
      %1665 = vmatprep.subr.mxu0 0.0
      %1666 = vmatpush2.msra.mxu0 0.0
      %1667 = vmatprep.subr.mxu0 0.0
      %1668 = vmatpush2.msra.mxu0 0.0
      %1669 = vmatprep.subr.mxu0 0.0
      %1670 = vmatpush2.msra.mxu0 0.0
      %1671 = vmatprep.subr.mxu0 0.0
      %1672 = vmatpush2.msra.mxu0 0.0
      %1673 = vmatprep.subr.mxu0 0.0
      %1674 = vmatpush2.msra.mxu0 0.0
      %1675 = vmatprep.subr.mxu0 0.0
      %1676 = vmatpush2.msra.mxu0 0.0
      %1677 = vmatprep.subr.mxu0 0.0
      %1678 = vmatpush2.msra.mxu0 0.0
      %1679 = vmatprep.subr.mxu0 0.0
      %1680 = vmatpush2.msra.mxu0 0.0
      %1681 = vmatprep.subr.mxu0 0.0
      %1682 = vmatpush2.msra.mxu0 0.0
      %1683 = vmatprep.subr.mxu0 0.0
      %1684 = vmatpush2.msra.mxu0 0.0
      %1685 = vmatprep.mubr.f32.mxu0 0.0
      %1686 = vmatmul.mubr.f32.gmra.mxu0 %v1616
      %v1687 = vpop.f32.mrf.mxu0
      %v1688 = vadd.f32 %v1607, %v1687
      %v1689 = vpop.f32.mrf.mxu0
      %1690 = vmatprep.mubr.f32.mxu0 0.0
      %1691 = vmatmul.mubr.f32.gmra.mxu0 %v1619
      %v1692 = vpop.f32.mrf.mxu0
      %v1693 = vadd.f32 %v1612, %v1692
      %v1694 = vpop.f32.mrf.mxu0
      %1695 = vdwg.mxu0
      %v1696 = vld [vmem:[%s650] sm:$0x1]
      %v1698 = vlaneseq
      %v1699 = vshrl.u32 %v1698, 7
      %v1700 = vsub.s32 0, %v1699
      %v1701 = vrot.slane %v1696, %v1700
      %v1703 = vadd.f32 %v1688, %v1701
      %v1704 = vadd.f32 %v1693, %v1701
      %v1705 = vadd.f32 %v1703, %v733
      %v1706 = vadd.f32 %v1704, %v734
      %v1707 = vld [vmem:[%s653] sm:$0x1]
      %v1708 = vld [vmem:[%s656] sm:$0x1]
      %v1709 = vsel %vm746, %v1705, 0.0
      %1710 = vadd.xlane.f32.xlu0 %v1709
      %v1711 = vpop.xlane.xlu0 %1710
      %v1712 = vsel %vm746, %v1706, 0.0
      %1713 = vadd.xlane.f32.xlu0 %v1712
      %v1714 = vpop.xlane.xlu0 %1713
      %v1715 = vrcp.pop 32.0
      %v1716 = vmul.f32 %v1711, %v1715
      %v1717 = vmul.f32 %v1714, %v1715
      %v1718 = vsub.f32 %v1705, %v1716
      %v1719 = vsub.f32 %v1706, %v1717
      %v1720 = vmul.f32 %v1718, %v1718
      %v1721 = vmul.f32 %v1719, %v1719
      %v1722 = vsel %vm746, %v1720, 0.0
      %1723 = vadd.xlane.f32.xlu0 %v1722
      %v1724 = vpop.xlane.xlu0 %1723
      %v1725 = vsel %vm746, %v1721, 0.0
      %1726 = vadd.xlane.f32.xlu0 %v1725
      %v1727 = vpop.xlane.xlu0 %1726
      %v1728 = vmul.f32 %v1724, %v1715
      %v1729 = vmul.f32 %v1727, %v1715
      %v1730 = vadd.f32 %v1728, 1e-12
      %v1731 = vadd.f32 %v1729, 1e-12
      %v1732 = vrsqrt.pop %v1730
      %v1733 = vrsqrt.pop %v1731
      %v1734 = vmul.f32 %v1718, %v1732
      %v1735 = vmul.f32 %v1719, %v1733
      %v1737 = vlaneseq
      %v1738 = vshrl.u32 %v1737, 7
      %v1739 = vsub.s32 0, %v1738
      %v1740 = vrot.slane %v1707, %v1739
      %v1742 = vmul.f32 %v1734, %v1740
      %v1743 = vmul.f32 %v1735, %v1740
      %v1745 = vlaneseq
      %v1746 = vshrl.u32 %v1745, 7
      %v1747 = vsub.s32 0, %v1746
      %v1748 = vrot.slane %v1708, %v1747
      %v1750 = vadd.f32 %v1742, %v1748
      %v1751 = vadd.f32 %v1743, %v1748
      %v1752 = vld [vmem:[%s661] sm:$0xff]
      %v1753 = vld [vmem:[%s661 + $0x8] sm:$0xff]
      %v1754 = vld [vmem:[%s661 + $0x10] sm:$0xff]
      %v1755 = vld [vmem:[%s661 + $0x18] sm:$0xff]
      %v1756 = vld [vmem:[%s664] sm:$0x1]
      %v1758 = vlaneseq
      %v1759 = vshrl.u32 %v1758, 7
      %v1760 = vsub.s32 0, %v1759
      %v1761 = vrot.slane %v1756, %v1760
      %v1764 = vsel %vm746, %v1750, 0
      %v1767 = vsel %vm746, %v1751, 0
      %1769 = vmatprep.subr.mxu0 0.0
      %1770 = vmatpush1.msra.mxu0 0.0
      %1771 = vmatprep.subr.mxu0 0.0
      %1772 = vmatpush1.msra.mxu0 0.0
      %1773 = vmatprep.subr.mxu0 0.0
      %1774 = vmatpush1.msra.mxu0 0.0
      %1775 = vmatprep.subr.mxu0 0.0
      %1776 = vmatpush1.msra.mxu0 0.0
      %1777 = vmatprep.subr.mxu0 0.0
      %1778 = vmatpush1.msra.mxu0 0.0
      %1779 = vmatprep.subr.mxu0 0.0
      %1780 = vmatpush1.msra.mxu0 0.0
      %1781 = vmatprep.subr.mxu0 0.0
      %1782 = vmatpush1.msra.mxu0 0.0
      %1783 = vmatprep.subr.mxu0 0.0
      %1784 = vmatpush1.msra.mxu0 0.0
      %1785 = vmatprep.subr.mxu0 0.0
      %1786 = vmatpush1.msra.mxu0 0.0
      %1787 = vmatprep.subr.mxu0 0.0
      %1788 = vmatpush1.msra.mxu0 0.0
      %1789 = vmatprep.subr.mxu0 0.0
      %1790 = vmatpush1.msra.mxu0 0.0
      %1791 = vmatprep.subr.mxu0 0.0
      %1792 = vmatpush1.msra.mxu0 0.0
      %1793 = vmatprep.subr.mxu0 0.0
      %1794 = vmatpush1.msra.mxu0 %v1755
      %1795 = vmatprep.subr.mxu0 0.0
      %1796 = vmatpush1.msra.mxu0 %v1754
      %1797 = vmatprep.subr.mxu0 0.0
      %1798 = vmatpush1.msra.mxu0 %v1753
      %1799 = vmatprep.subr.mxu0 0.0
      %1800 = vmatpush1.msra.mxu0 %v1752
      %1801 = vmatprep.subr.mxu0 0.0
      %1802 = vmatpush2.msra.mxu0 0.0
      %1803 = vmatprep.subr.mxu0 0.0
      %1804 = vmatpush2.msra.mxu0 0.0
      %1805 = vmatprep.subr.mxu0 0.0
      %1806 = vmatpush2.msra.mxu0 0.0
      %1807 = vmatprep.subr.mxu0 0.0
      %1808 = vmatpush2.msra.mxu0 0.0
      %1809 = vmatprep.subr.mxu0 0.0
      %1810 = vmatpush2.msra.mxu0 0.0
      %1811 = vmatprep.subr.mxu0 0.0
      %1812 = vmatpush2.msra.mxu0 0.0
      %1813 = vmatprep.subr.mxu0 0.0
      %1814 = vmatpush2.msra.mxu0 0.0
      %1815 = vmatprep.subr.mxu0 0.0
      %1816 = vmatpush2.msra.mxu0 0.0
      %1817 = vmatprep.subr.mxu0 0.0
      %1818 = vmatpush2.msra.mxu0 0.0
      %1819 = vmatprep.subr.mxu0 0.0
      %1820 = vmatpush2.msra.mxu0 0.0
      %1821 = vmatprep.subr.mxu0 0.0
      %1822 = vmatpush2.msra.mxu0 0.0
      %1823 = vmatprep.subr.mxu0 0.0
      %1824 = vmatpush2.msra.mxu0 0.0
      %1825 = vmatprep.subr.mxu0 0.0
      %1826 = vmatpush2.msra.mxu0 0.0
      %1827 = vmatprep.subr.mxu0 0.0
      %1828 = vmatpush2.msra.mxu0 0.0
      %1829 = vmatprep.subr.mxu0 0.0
      %1830 = vmatpush2.msra.mxu0 0.0
      %1831 = vmatprep.subr.mxu0 0.0
      %1832 = vmatpush2.msra.mxu0 0.0
      %1833 = vmatprep.mubr.f32.mxu0 0.0
      %1834 = vmatmul.mubr.f32.gmra.mxu0 %v1764
      %v1835 = vpop.f32.mrf.mxu0
      %v1836 = vadd.f32 %v1761, %v1835
      %v1837 = vpop.f32.mrf.mxu0
      %1838 = vmatprep.mubr.f32.mxu0 0.0
      %1839 = vmatmul.mubr.f32.gmra.mxu0 %v1767
      %v1840 = vpop.f32.mrf.mxu0
      %v1841 = vadd.f32 %v1761, %v1840
      %v1842 = vpop.f32.mrf.mxu0
      %1843 = vdwg.mxu0
      %v1844 = vmul.f32 %v1836, 0.5
      %v1845 = vmul.f32 %v1841, 0.5
      %v1846 = vmul.f32 %v1836, 0.70710677
      %v1847 = vmul.f32 %v1841, 0.70710677
      %v1848 = vand.u32 2147483647, %v1846
      %v1849 = vand.u32 2147483647, %v1847
      %v1850 = vmul.f32 %v1848, 0.3275911
      %v1851 = vmul.f32 %v1849, 0.3275911
      %v1852 = vadd.f32 %v1850, 1.0
      %v1853 = vadd.f32 %v1851, 1.0
      %v1854 = vrcp.pop %v1852
      %v1855 = vmul.f32 1.0, %v1854
      %v1856 = vrcp.pop %v1853
      %v1857 = vmul.f32 1.0, %v1856
      %v1858 = vmul.f32 %v1855, 1.0614054
      %v1859 = vmul.f32 %v1857, 1.0614054
      %v1860 = vadd.f32 %v1858, -1.4531521
      %v1861 = vadd.f32 %v1859, -1.4531521
      %v1862 = vmul.f32 %v1860, %v1855
      %v1863 = vmul.f32 %v1861, %v1857
      %v1864 = vadd.f32 %v1862, 1.4214138
      %v1865 = vadd.f32 %v1863, 1.4214138
      %v1866 = vmul.f32 %v1864, %v1855
      %v1867 = vmul.f32 %v1865, %v1857
      %v1868 = vadd.f32 %v1866, -0.28449672
      %v1869 = vadd.f32 %v1867, -0.28449672
      %v1870 = vmul.f32 %v1868, %v1855
      %v1871 = vmul.f32 %v1869, %v1857
      %v1872 = vadd.f32 %v1870, 0.2548296
      %v1873 = vadd.f32 %v1871, 0.2548296
      %v1874 = vmul.f32 %v1872, %v1855
      %v1875 = vmul.f32 %v1873, %v1857
      %v1876 = vsub.f32 0.0, %v1848
      %v1877 = vsub.f32 0.0, %v1849
      %v1878 = vmul.f32 %v1876, %v1848
      %v1879 = vmul.f32 %v1877, %v1849
      %v1880 = vmul.f32 %v1878, 1.442695
      %v1881 = vpow.pop %v1880
      %v1882 = vmul.f32 %v1879, 1.442695
      %v1883 = vpow.pop %v1882
      %v1884 = vmul.f32 %v1874, %v1881
      %v1885 = vmul.f32 %v1875, %v1883
      %v1886 = vsub.f32 1.0, %v1884
      %v1887 = vsub.f32 1.0, %v1885
      %vm1888 = vcmp.ge.f32.partialorder %v1846, 0.0
      %vm1889 = vcmp.ge.f32.partialorder %v1847, 0.0
      %v1890 = vsub.f32 0.0, %v1886
      %v1891 = vsub.f32 0.0, %v1887
      %v1892 = vsel %vm1888, %v1886, %v1890
      %v1893 = vsel %vm1889, %v1887, %v1891
      %v1894 = vadd.f32 %v1892, 1.0
      %v1895 = vadd.f32 %v1893, 1.0
      %v1896 = vmul.f32 %v1844, %v1894
      %v1897 = vmul.f32 %v1845, %v1895
      %v1898 = vld [vmem:[%s669] sm:$0xff]
      %v1899 = vld [vmem:[%s669 + $0x8] sm:$0xff]
      %v1900 = vld [vmem:[%s669 + $0x10] sm:$0xff]
      %v1901 = vld [vmem:[%s669 + $0x18] sm:$0xff]
      %v1902 = vld [vmem:[%s669 + $0x20] sm:$0xff]
      %v1903 = vld [vmem:[%s669 + $0x28] sm:$0xff]
      %v1904 = vld [vmem:[%s669 + $0x30] sm:$0xff]
      %v1905 = vld [vmem:[%s669 + $0x38] sm:$0xff]
      %v1906 = vld [vmem:[%s672] sm:$0x1]
      %v1908 = vlaneseq
      %v1909 = vshrl.u32 %v1908, 7
      %v1910 = vsub.s32 0, %v1909
      %v1911 = vrot.slane %v1906, %v1910
      %vm1913 = vcmask 523264
      %v1915 = vsel %vm1913, %v1896, 0
      %v1918 = vsel %vm1913, %v1897, 0
      %1920 = vmatprep.subr.mxu0 0.0
      %1921 = vmatpush1.msra.mxu0 0.0
      %1922 = vmatprep.subr.mxu0 0.0
      %1923 = vmatpush1.msra.mxu0 0.0
      %1924 = vmatprep.subr.mxu0 0.0
      %1925 = vmatpush1.msra.mxu0 0.0
      %1926 = vmatprep.subr.mxu0 0.0
      %1927 = vmatpush1.msra.mxu0 0.0
      %1928 = vmatprep.subr.mxu0 0.0
      %1929 = vmatpush1.msra.mxu0 0.0
      %1930 = vmatprep.subr.mxu0 0.0
      %1931 = vmatpush1.msra.mxu0 0.0
      %1932 = vmatprep.subr.mxu0 0.0
      %1933 = vmatpush1.msra.mxu0 0.0
      %1934 = vmatprep.subr.mxu0 0.0
      %1935 = vmatpush1.msra.mxu0 0.0
      %1936 = vmatprep.subr.mxu0 0.0
      %1937 = vmatpush1.msra.mxu0 %v1905
      %1938 = vmatprep.subr.mxu0 0.0
      %1939 = vmatpush1.msra.mxu0 %v1904
      %1940 = vmatprep.subr.mxu0 0.0
      %1941 = vmatpush1.msra.mxu0 %v1903
      %1942 = vmatprep.subr.mxu0 0.0
      %1943 = vmatpush1.msra.mxu0 %v1902
      %1944 = vmatprep.subr.mxu0 0.0
      %1945 = vmatpush1.msra.mxu0 %v1901
      %1946 = vmatprep.subr.mxu0 0.0
      %1947 = vmatpush1.msra.mxu0 %v1900
      %1948 = vmatprep.subr.mxu0 0.0
      %1949 = vmatpush1.msra.mxu0 %v1899
      %1950 = vmatprep.subr.mxu0 0.0
      %1951 = vmatpush1.msra.mxu0 %v1898
      %1952 = vmatprep.subr.mxu0 0.0
      %1953 = vmatpush2.msra.mxu0 0.0
      %1954 = vmatprep.subr.mxu0 0.0
      %1955 = vmatpush2.msra.mxu0 0.0
      %1956 = vmatprep.subr.mxu0 0.0
      %1957 = vmatpush2.msra.mxu0 0.0
      %1958 = vmatprep.subr.mxu0 0.0
      %1959 = vmatpush2.msra.mxu0 0.0
      %1960 = vmatprep.subr.mxu0 0.0
      %1961 = vmatpush2.msra.mxu0 0.0
      %1962 = vmatprep.subr.mxu0 0.0
      %1963 = vmatpush2.msra.mxu0 0.0
      %1964 = vmatprep.subr.mxu0 0.0
      %1965 = vmatpush2.msra.mxu0 0.0
      %1966 = vmatprep.subr.mxu0 0.0
      %1967 = vmatpush2.msra.mxu0 0.0
      %1968 = vmatprep.subr.mxu0 0.0
      %1969 = vmatpush2.msra.mxu0 0.0
      %1970 = vmatprep.subr.mxu0 0.0
      %1971 = vmatpush2.msra.mxu0 0.0
      %1972 = vmatprep.subr.mxu0 0.0
      %1973 = vmatpush2.msra.mxu0 0.0
      %1974 = vmatprep.subr.mxu0 0.0
      %1975 = vmatpush2.msra.mxu0 0.0
      %1976 = vmatprep.subr.mxu0 0.0
      %1977 = vmatpush2.msra.mxu0 0.0
      %1978 = vmatprep.subr.mxu0 0.0
      %1979 = vmatpush2.msra.mxu0 0.0
      %1980 = vmatprep.subr.mxu0 0.0
      %1981 = vmatpush2.msra.mxu0 0.0
      %1982 = vmatprep.subr.mxu0 0.0
      %1983 = vmatpush2.msra.mxu0 0.0
      %1984 = vmatprep.mubr.f32.mxu0 0.0
      %1985 = vmatmul.mubr.f32.gmra.mxu0 %v1915
      %v1986 = vpop.f32.mrf.mxu0
      %v1987 = vadd.f32 %v1911, %v1986
      %v1988 = vpop.f32.mrf.mxu0
      %1989 = vmatprep.mubr.f32.mxu0 0.0
      %1990 = vmatmul.mubr.f32.gmra.mxu0 %v1918
      %v1991 = vpop.f32.mrf.mxu0
      %v1992 = vadd.f32 %v1911, %v1991
      %v1993 = vpop.f32.mrf.mxu0
      %1994 = vdwg.mxu0
      %v1995 = vadd.f32 %v1987, %v1750
      %v1996 = vadd.f32 %v1992, %v1751
      %v1997 = vld [vmem:[%s675] sm:$0x1]
      %v1998 = vld [vmem:[%s678] sm:$0x1]
      %v1999 = vsel %vm746, %v1995, 0.0
      %2000 = vadd.xlane.f32.xlu0 %v1999
      %v2001 = vpop.xlane.xlu0 %2000
      %v2002 = vsel %vm746, %v1996, 0.0
      %2003 = vadd.xlane.f32.xlu0 %v2002
      %v2004 = vpop.xlane.xlu0 %2003
      %v2005 = vmul.f32 %v2001, %v1715
      %v2006 = vmul.f32 %v2004, %v1715
      %v2007 = vsub.f32 %v1995, %v2005
      %v2008 = vsub.f32 %v1996, %v2006
      %v2009 = vmul.f32 %v2007, %v2007
      %v2010 = vmul.f32 %v2008, %v2008
      %v2011 = vsel %vm746, %v2009, 0.0
      %2012 = vadd.xlane.f32.xlu0 %v2011
      %v2013 = vpop.xlane.xlu0 %2012
      %v2014 = vsel %vm746, %v2010, 0.0
      %2015 = vadd.xlane.f32.xlu0 %v2014
      %v2016 = vpop.xlane.xlu0 %2015
      %v2017 = vmul.f32 %v2013, %v1715
      %v2018 = vmul.f32 %v2016, %v1715
      %v2019 = vadd.f32 %v2017, 1e-12
      %v2020 = vadd.f32 %v2018, 1e-12
      %v2021 = vrsqrt.pop %v2019
      %v2022 = vrsqrt.pop %v2020
      %v2023 = vmul.f32 %v2007, %v2021
      %v2024 = vmul.f32 %v2008, %v2022
      %v2026 = vlaneseq
      %v2027 = vshrl.u32 %v2026, 7
      %v2028 = vsub.s32 0, %v2027
      %v2029 = vrot.slane %v1997, %v2028
      %v2031 = vmul.f32 %v2023, %v2029
      %v2032 = vmul.f32 %v2024, %v2029
      %v2034 = vlaneseq
      %v2035 = vshrl.u32 %v2034, 7
      %v2036 = vsub.s32 0, %v2035
      %v2037 = vrot.slane %v1998, %v2036
      %v2039 = vadd.f32 %v2031, %v2037
      %v2040 = vadd.f32 %v2032, %v2037
      %2041 = vst.msk [vmem:[#allocation2] sm:$0xff] %vm746, %v2039
      %2042 = vst.msk [vmem:[#allocation2 + $0x8] sm:$0xff] %vm746, %v2040
      %2043 = vst.msk [vmem:[%s16] sm:$0xff] %vm746, %v2039
      %2044 = vst.msk [vmem:[%s16 + $0x8] sm:$0xff] %vm746, %v2040
      // Predicated region
      $region89: #{bert_multitask_multilabel_forward.2} parent=83 // pred_check
        %p2045 = pneg %p436
      $region90: #{bert_multitask_multilabel_forward.2} parent=83 // pred_check_branch
        %2047 = sbr.rel (%p2045) target = $region92
      $region91: #{bert_multitask_multilabel_forward.2} parent=83 // pred_region
        _
      $region92: #{bert_multitask_multilabel_forward.2} parent=83 // pred_fallthru
        _
      // Predicated region
      $region93: #{bert_multitask_multilabel_forward.2} parent=83 // pred_check
        %p2048 = pneg %p436
      $region94: #{bert_multitask_multilabel_forward.2} parent=83 // pred_check_branch
        %2050 = sbr.rel (%p2048) target = $region96
      $region95: #{bert_multitask_multilabel_forward.2} parent=83 // pred_region
        _
      $region96: #{bert_multitask_multilabel_forward.2} parent=83 // pred_fallthru
        _
    $region84: #{bert_multitask_multilabel_forward.2} parent=5 // pred_fallthru
      _
    %p2051 = scmp.le.s32.totalorder 2, %s22
    // Predicated region
    $region97: #{bert_multitask_multilabel_forward.2} parent=5 // pred_check
      %p2052 = pneg %p2051
    $region98: #{bert_multitask_multilabel_forward.2} parent=5 // pred_check_branch
      %2054 = sbr.rel (%p2052) target = $region100
    $region99: #{bert_multitask_multilabel_forward.2} parent=5 // pred_region
      %s2055 = ssub.s32 %s22, 2
    $region100: #{bert_multitask_multilabel_forward.2} parent=5 // pred_fallthru
      _
  $region6: #{bert_multitask_multilabel_forward.2} parent=0 // loop_footer
    %s26 = sadd.s32 1, %s22
  $region7: #{bert_multitask_multilabel_forward.2} parent=0 // loop_footer_branch
    %21 = sbr.rel target = $region3
  $region8: #{bert_multitask_multilabel_forward.2} parent=0 // loop_exit
    _

</llo_original>
